<compile_context>
chip_gen: v6e
topology: v6e:2x2x1
jax: 0.10.0
libtpu: 0.0.40
codegen_flags: <defaults>
</compile_context>

<pallas_src>
import jax
import jax.numpy as jnp
from jax import lax
from jax.experimental import pallas as pl
from jax.experimental.pallas import tpu as pltpu


def bottleneck_kernel(xpad_hbm, w1_ref, w2_ref, w3_ref, b1_ref, b2_ref, b3_ref,
                      out_ref, xwin, copy_sem):
    TH2, W, Cin = xwin.shape          # TH2 = tile_h + 2 (one halo row on each side)
    TH = TH2 - 2
    P = w1_ref.shape[1]
    K2 = w2_ref.shape[1]              # 3 * P
    Cout = w3_ref.shape[1]
    H = pl.num_programs(1) * TH

    n = pl.program_id(0)
    i = pl.program_id(1)

    # ---- manual DMA: (tile_h + 2)-row window of the H-padded input (always in bounds)
    row0 = pl.multiple_of(i * TH, TH)
    cp = pltpu.make_async_copy(xpad_hbm.at[n, pl.ds(row0, TH2)], xwin, copy_sem)
    cp.start()
    cp.wait()

    # ---- conv1 (1x1, BN1 scale folded) + bias + ReLU on all TH+2 rows (bf16 -> MXU)
    xb = xwin[...].reshape(TH2 * W, Cin).astype(jnp.bfloat16)
    y = jnp.dot(xb, w1_ref[...], preferred_element_type=jnp.float32)
    y = jnp.maximum(y + b1_ref[...], 0.0).reshape(TH2, W, P)

    # Halo rows that fall outside the image must be exactly zero (the 3x3 conv
    # zero-pads conv1's *output*), not relu(b1) of the zero-padded input rows.
    row = lax.broadcasted_iota(jnp.int32, (TH2, W, P), 0) + (i * TH - 1)
    y = jnp.where((row >= 0) & (row < H), y, 0.0)

    # ---- conv2 (3x3, BN2 scale folded): build the 3 W-shifted copies once, concat
    #      along channels, then 3 MXU matmuls with K = 3P (one per dy; aligned
    #      leading-dim slices only -- no per-tap sublane-offset relayouts).
    zcol = jnp.zeros((TH2, 1, P), jnp.float32)
    left = jnp.concatenate([zcol, y[:, :W - 1, :]], axis=1)    # left[:, c]  = y[:, c-1]
    right = jnp.concatenate([y[:, 1:, :], zcol], axis=1)       # right[:, c] = y[:, c+1]
    ycat = jnp.concatenate([left, y, right], axis=-1).astype(jnp.bfloat16)  # (TH2, W, 3P)

    w2 = w2_ref[...]                                           # (3, 3P, P) bf16
    acc = jnp.dot(ycat[0:TH].reshape(TH * W, K2), w2[0],
                  preferred_element_type=jnp.float32)
    acc = acc + jnp.dot(ycat[1:TH + 1].reshape(TH * W, K2), w2[1],
                        preferred_element_type=jnp.float32)
    acc = acc + jnp.dot(ycat[2:TH + 2].reshape(TH * W, K2), w2[2],
                        preferred_element_type=jnp.float32)
    z = jnp.maximum(acc + b2_ref[...], 0.0)

    # ---- conv3 (1x1, BN3 scale folded) + bias, identity residual (f32), ReLU
    o = jnp.dot(z.astype(jnp.bfloat16), w3_ref[...],
                preferred_element_type=jnp.float32)
    o = o + b3_ref[...]
    res = xwin[1:TH + 1, :, :].reshape(TH * W, Cin)            # re-read from VMEM window
    o = jnp.maximum(o + res, 0.0)
    out_ref[...] = o.reshape(1, TH, W, Cout).astype(out_ref.dtype)


def _fold_bn_scale_into_weights(w1, w2, w3, s1, s2, s3):
    """Fold inference-BN per-channel scales into the conv weights, cast to bf16."""
    P = w1.shape[1]
    Cout = w3.shape[1]
    w1f = (w1 * s1.reshape(1, P)).astype(jnp.bfloat16)                 # (Cin, P)
    w2f = (w2 * s2.reshape(1, 1, 1, P)).astype(jnp.bfloat16)           # (3, 3, P, P) HWIO
    w3f = (w3 * s3.reshape(1, Cout)).astype(jnp.bfloat16)              # (P, Cout)
    return w1f, w2f, w3f


def bottleneck_pallas(x, w1, w2, w3, s1, b1, s2, b2, s3, b3, *, tile_h=8):
    N, H, W, Cin = x.shape
    P = w1.shape[1]
    Cout = w3.shape[1]
    assert Cin == Cout, "identity residual requires inplanes == planes * expansion"
    # TODO(synk): stride != 1 / downsample bottleneck variant is not implemented here.
    TH = tile_h
    assert H % TH == 0, "H must be divisible by tile_h"
    # TODO(synk): ragged H (H % tile_h != 0) would need a masked/BoundedSlice tail tile.

    w1f, w2f, w3f = _fold_bn_scale_into_weights(w1, w2, w3, s1, s2, s3)
    w2cat = w2f.reshape(3, 3 * P, P)           # [dy] -> stack over dx of (P, P)
    b1f = b1.reshape(1, P).astype(jnp.float32)
    b2f = b2.reshape(1, P).astype(jnp.float32)
    b3f = b3.reshape(1, Cout).astype(jnp.float32)

    # One zero halo row above/below so every (tile_h + 2)-row DMA window is in bounds;
    # the kernel re-masks those rows to exactly zero after conv1.
    xpad = jnp.pad(x, ((0, 0), (1, 1), (0, 0), (0, 0)))

    # Explicit VMEM budget: double-buffered out block + input window scratch + weights
    # + conv1/conv2 intermediates, with headroom; capped at v7x's 64 MiB physical VMEM.
    working_set = (
        2 * TH * W * Cout * 4
        + (TH + 2) * W * Cin * 4
        + 2 * (Cin * P + 9 * P * P + P * Cout)
        + (TH + 2) * W * (4 * P + 2 * 3 * P) * 2
    )
    vmem_limit = int(min(64 * 1024 * 1024, max(16 * 1024 * 1024, 4 * working_set)))

    return pl.pallas_call(
        bottleneck_kernel,
        out_shape=jax.ShapeDtypeStruct((N, H, W, Cout), x.dtype),
        grid=(N, H // TH),
        in_specs=[
            pl.BlockSpec(memory_space=pl.ANY),                        # x (H-padded), manual DMA
            pl.BlockSpec((Cin, P), lambda n, i: (0, 0)),              # w1 (bf16, s1 folded)
            pl.BlockSpec((3, 3 * P, P), lambda n, i: (0, 0, 0)),      # w2 (bf16, s2 folded, dx-concat)
            pl.BlockSpec((P, Cout), lambda n, i: (0, 0)),             # w3 (bf16, s3 folded)
            pl.BlockSpec((1, P), lambda n, i: (0, 0)),                # bn1 bias
            pl.BlockSpec((1, P), lambda n, i: (0, 0)),                # bn2 bias
            pl.BlockSpec((1, Cout), lambda n, i: (0, 0)),             # bn3 bias
        ],
        out_specs=pl.BlockSpec((1, TH, W, Cout), lambda n, i: (n, i, 0, 0)),
        scratch_shapes=[
            pltpu.VMEM((TH + 2, W, Cin), x.dtype),                    # halo'd input window
            pltpu.SemaphoreType.DMA,
        ],
        compiler_params=pltpu.CompilerParams(
            dimension_semantics=("parallel", "parallel"),
            vmem_limit_bytes=vmem_limit),
    )(xpad, w1f, w2cat, w3f, b1f, b2f, b3f)


def bottleneck_ref(x, w1, w2, w3, s1, b1, s2, b2, s3, b3):
    """Pure-JAX reference (lax convs) mirroring the kernel's bf16-operand /
    f32-accumulate numerics and folded-BN parameterisation."""
    Cin = x.shape[-1]
    P = w1.shape[1]
    Cout = w3.shape[1]
    w1f, w2f, w3f = _fold_bn_scale_into_weights(w1, w2, w3, s1, s2, s3)
    b1f = b1.reshape(1, P)
    b2f = b2.reshape(1, P)
    b3f = b3.reshape(1, Cout)
    dn = ('NHWC', 'HWIO', 'NHWC')
    y = lax.conv_general_dilated(x.astype(jnp.bfloat16), w1f.reshape(1, 1, Cin, P),
                                 (1, 1), 'VALID', dimension_numbers=dn,
                                 preferred_element_type=jnp.float32)
    y = jnp.maximum(y + b1f, 0.0)
    z = lax.conv_general_dilated(y.astype(jnp.bfloat16), w2f, (1, 1),
                                 ((1, 1), (1, 1)), dimension_numbers=dn,
                                 preferred_element_type=jnp.float32)
    z = jnp.maximum(z + b2f, 0.0)
    o = lax.conv_general_dilated(z.astype(jnp.bfloat16), w3f.reshape(1, 1, P, Cout),
                                 (1, 1), 'VALID', dimension_numbers=dn,
                                 preferred_element_type=jnp.float32)
    o = o + b3f
    return jnp.maximum(o + x, 0.0)


def fold_bn(key, c, eps=1e-5):
    """Deterministic BN params folded to per-channel (scale, bias)."""
    kg, kb, km, kv = jax.random.split(key, 4)
    gamma = jax.random.uniform(kg, (c,), jnp.float32, 0.5, 1.5)
    beta = jax.random.uniform(kb, (c,), jnp.float32, -0.1, 0.1)
    mean = jax.random.uniform(km, (c,), jnp.float32, -0.1, 0.1)
    var = jax.random.uniform(kv, (c,), jnp.float32, 0.5, 1.5)
    scale = gamma * lax.rsqrt(var + eps)
    bias = beta - mean * scale
    return scale, bias


if __name__ == "__main__":
    key = jax.random.PRNGKey(0)
    N, H, Wsp = 2, 16, 16
    planes = 32
    expansion = 4
    inplanes = planes * expansion      # 128: identity residual path (downsample=None)

    keys = jax.random.split(key, 7)
    # NHWC input (a PyTorch NCHW input would be x.transpose(0, 2, 3, 1))
    x = jax.random.normal(keys[0], (N, H, Wsp, inplanes), jnp.float32)

    # conv weights (no bias, matching bias=False)
    w1 = jax.random.normal(keys[1], (inplanes, planes), jnp.float32) * (1.0 / inplanes ** 0.5)
    w2 = jax.random.normal(keys[2], (3, 3, planes, planes), jnp.float32) * (1.0 / (9 * planes) ** 0.5)
    w3 = jax.random.normal(keys[3], (planes, inplanes), jnp.float32) * (1.0 / planes ** 0.5)

    s1, b1 = fold_bn(keys[4], planes)
    s2, b2 = fold_bn(keys[5], planes)
    s3, b3 = fold_bn(keys[6], inplanes)

    out = bottleneck_pallas(x, w1, w2, w3, s1, b1, s2, b2, s3, b3, tile_h=8)
    jax.block_until_ready(out)

    ref = bottleneck_ref(x, w1, w2, w3, s1, b1, s2, b2, s3, b3)
    assert out.shape == (N, H, Wsp, inplanes)
    max_err = float(jnp.max(jnp.abs(out - ref)))
    assert jnp.allclose(out, ref, atol=3e-2, rtol=3e-2), (
        f"mismatch vs reference (max |err| = {max_err})")

    print("KERNEL_OK")
</pallas_src>

<mosaic_0001>
module attributes {stable_mosaic.version = 11 : i64} {
  func.func @bottleneck_kernel(%arg0: i32, %arg1: i32, %arg2: memref<2x18x16x128xf32, #tpu.memory_space<any>>, %arg3: memref<128x32xbf16, #tpu.memory_space<vmem>>, %arg4: memref<3x96x32xbf16, #tpu.memory_space<vmem>>, %arg5: memref<32x128xbf16, #tpu.memory_space<vmem>>, %arg6: memref<1x32xf32, #tpu.memory_space<vmem>>, %arg7: memref<1x32xf32, #tpu.memory_space<vmem>>, %arg8: memref<1x128xf32, #tpu.memory_space<vmem>>, %arg9: memref<1x8x16x128xf32, #tpu.memory_space<vmem>>, %arg10: memref<10x16x128xf32, #tpu.memory_space<vmem>>, %arg11: memref<!tpu.dma_semaphore, #tpu.memory_space<semaphore_mem>>) attributes {dimension_semantics = [#tpu.dimension_semantics<parallel>, #tpu.dimension_semantics<parallel>], iteration_bounds = array<i64: 2, 2>, scalar_prefetch = 0 : i64, scratch_operands = 2 : i64, tpu.core_type = #tpu.core_type<tc>, window_params = [{}, {pipeline_mode = #tpu.pipeline_mode<synchronous>, transform_indices = @transform_1, window_bounds = array<i64: 128, 32>}, {pipeline_mode = #tpu.pipeline_mode<synchronous>, transform_indices = @transform_2, window_bounds = array<i64: 3, 96, 32>}, {pipeline_mode = #tpu.pipeline_mode<synchronous>, transform_indices = @transform_3, window_bounds = array<i64: 32, 128>}, {pipeline_mode = #tpu.pipeline_mode<synchronous>, transform_indices = @transform_4, window_bounds = array<i64: 1, 32>}, {pipeline_mode = #tpu.pipeline_mode<synchronous>, transform_indices = @transform_5, window_bounds = array<i64: 1, 32>}, {pipeline_mode = #tpu.pipeline_mode<synchronous>, transform_indices = @transform_6, window_bounds = array<i64: 1, 128>}, {transform_indices = @transform_7, window_bounds = array<i64: 1, 8, 16, 128>}]} {
    %c8_i32 = arith.constant 8 : i32
    %0 = arith.muli %arg1, %c8_i32 : i32
    %1 = tpu.assume_multiple %0, 8 : i32
    %c0_i32 = arith.constant 0 : i32
    %c0_i32_0 = arith.constant 0 : i32
    %2 = tpu.memref_slice %arg2[%arg0, %1, %c0_i32, %c0_i32_0] : memref<2x18x16x128xf32, #tpu.memory_space<any>> -> memref<1x10x16x128xf32, #tpu.memory_space<any>>
    %3 = tpu.memref_squeeze %2 : memref<1x10x16x128xf32, #tpu.memory_space<any>> -> memref<10x16x128xf32, #tpu.memory_space<any>>
    tpu.enqueue_dma source(%3 : memref<10x16x128xf32, #tpu.memory_space<any>>) target(%arg10 : memref<10x16x128xf32, #tpu.memory_space<vmem>>) target_semaphore(%arg11 : memref<!tpu.dma_semaphore, #tpu.memory_space<semaphore_mem>>)
    %c0_i32_1 = arith.constant 0 : i32
    %c0_i32_2 = arith.constant 0 : i32
    %4 = tpu.memref_slice %arg2[%arg0, %1, %c0_i32_1, %c0_i32_2] : memref<2x18x16x128xf32, #tpu.memory_space<any>> -> memref<1x10x16x128xf32, #tpu.memory_space<any>>
    %5 = tpu.memref_squeeze %4 : memref<1x10x16x128xf32, #tpu.memory_space<any>> -> memref<10x16x128xf32, #tpu.memory_space<any>>
    tpu.wait_dma2 semaphore(%arg11 : memref<!tpu.dma_semaphore, #tpu.memory_space<semaphore_mem>>) src(%5 : memref<10x16x128xf32, #tpu.memory_space<any>>) dst(%arg10 : memref<10x16x128xf32, #tpu.memory_space<vmem>>)
    %c0 = arith.constant 0 : index
    %c0_3 = arith.constant 0 : index
    %c0_4 = arith.constant 0 : index
    %6 = vector.load %arg10[%c0, %c0_3, %c0_4] : memref<10x16x128xf32, #tpu.memory_space<vmem>>, vector<10x16x128xf32>
    %7 = vector.shape_cast %6 : vector<10x16x128xf32> to vector<160x128xf32>
    %8 = arith.truncf %7 : vector<160x128xf32> to vector<160x128xbf16>
    %c0_5 = arith.constant 0 : index
    %c0_6 = arith.constant 0 : index
    %9 = vector.load %arg3[%c0_5, %c0_6] : memref<128x32xbf16, #tpu.memory_space<vmem>>, vector<128x32xbf16>
    %cst = arith.constant dense<0.000000e+00> : vector<160x32xf32>
    %10 = tpu.matmul %8, %9, %cst {dimension_numbers = #tpu.dot_dimension_numbers<[1], [0], [0], [1], [0, 0, 1, 1], [], []>} : vector<160x128xbf16>, vector<128x32xbf16>, vector<160x32xf32> -> vector<160x32xf32>
    %c0_7 = arith.constant 0 : index
    %c0_8 = arith.constant 0 : index
    %11 = vector.load %arg6[%c0_7, %c0_8] : memref<1x32xf32, #tpu.memory_space<vmem>>, vector<1x32xf32>
    %12 = vector.broadcast %11 : vector<1x32xf32> to vector<160x32xf32>
    %13 = arith.addf %10, %12 : vector<160x32xf32>
    %cst_9 = arith.constant 0.000000e+00 : f32
    %14 = vector.broadcast %cst_9 : f32 to vector<160x32xf32>
    %15 = arith.maximumf %13, %14 : vector<160x32xf32>
    %16 = vector.shape_cast %15 : vector<160x32xf32> to vector<10x16x32xf32>
    %17 = tpu.iota {dimensions = array<i32: 0>} : vector<10x16x32xi32>
    %c8_i32_10 = arith.constant 8 : i32
    %18 = arith.muli %arg1, %c8_i32_10 : i32
    %c1_i32 = arith.constant 1 : i32
    %19 = arith.subi %18, %c1_i32 : i32
    %20 = vector.broadcast %19 : i32 to vector<10x16x32xi32>
    %21 = arith.addi %17, %20 : vector<10x16x32xi32>
    %c0_i32_11 = arith.constant 0 : i32
    %22 = vector.broadcast %c0_i32_11 : i32 to vector<10x16x32xi32>
    %23 = arith.cmpi sge, %21, %22 : vector<10x16x32xi32>
    %c16_i32 = arith.constant 16 : i32
    %24 = vector.broadcast %c16_i32 : i32 to vector<10x16x32xi32>
    %25 = arith.cmpi slt, %21, %24 : vector<10x16x32xi32>
    %26 = arith.andi %23, %25 : vector<10x16x32xi1>
    %cst_12 = arith.constant 0.000000e+00 : f32
    %27 = vector.broadcast %cst_12 : f32 to vector<10x16x32xf32>
    %28 = arith.select %26, %16, %27 : vector<10x16x32xi1>, vector<10x16x32xf32>
    %cst_13 = arith.constant 0.000000e+00 : f32
    %29 = vector.broadcast %cst_13 : f32 to vector<10x1x32xf32>
    %30 = vector.extract_strided_slice %28 {offsets = [0, 0, 0], sizes = [10, 15, 32], strides = [1, 1, 1]} : vector<10x16x32xf32> to vector<10x15x32xf32>
    %31 = tpu.concatenate %29, %30 in 1 : vector<10x1x32xf32>, vector<10x15x32xf32> -> vector<10x16x32xf32>
    %32 = vector.extract_strided_slice %28 {offsets = [0, 1, 0], sizes = [10, 15, 32], strides = [1, 1, 1]} : vector<10x16x32xf32> to vector<10x15x32xf32>
    %33 = tpu.concatenate %32, %29 in 1 : vector<10x15x32xf32>, vector<10x1x32xf32> -> vector<10x16x32xf32>
    %34 = tpu.concatenate %31, %28, %33 in 2 : vector<10x16x32xf32>, vector<10x16x32xf32>, vector<10x16x32xf32> -> vector<10x16x96xf32>
    %35 = arith.truncf %34 : vector<10x16x96xf32> to vector<10x16x96xbf16>
    %c0_14 = arith.constant 0 : index
    %c0_15 = arith.constant 0 : index
    %c0_16 = arith.constant 0 : index
    %36 = vector.load %arg4[%c0_14, %c0_15, %c0_16] : memref<3x96x32xbf16, #tpu.memory_space<vmem>>, vector<3x96x32xbf16>
    %37 = vector.extract_strided_slice %35 {offsets = [0, 0, 0], sizes = [8, 16, 96], strides = [1, 1, 1]} : vector<10x16x96xbf16> to vector<8x16x96xbf16>
    %38 = vector.shape_cast %37 : vector<8x16x96xbf16> to vector<128x96xbf16>
    %39 = vector.extract_strided_slice %36 {offsets = [0, 0, 0], sizes = [1, 96, 32], strides = [1, 1, 1]} : vector<3x96x32xbf16> to vector<1x96x32xbf16>
    %40 = vector.shape_cast %39 : vector<1x96x32xbf16> to vector<96x32xbf16>
    %cst_17 = arith.constant dense<0.000000e+00> : vector<128x32xf32>
    %41 = tpu.matmul %38, %40, %cst_17 {dimension_numbers = #tpu.dot_dimension_numbers<[1], [0], [0], [1], [0, 0, 1, 1], [], []>} : vector<128x96xbf16>, vector<96x32xbf16>, vector<128x32xf32> -> vector<128x32xf32>
    %42 = vector.extract_strided_slice %35 {offsets = [1, 0, 0], sizes = [8, 16, 96], strides = [1, 1, 1]} : vector<10x16x96xbf16> to vector<8x16x96xbf16>
    %43 = vector.shape_cast %42 : vector<8x16x96xbf16> to vector<128x96xbf16>
    %44 = vector.extract_strided_slice %36 {offsets = [1, 0, 0], sizes = [1, 96, 32], strides = [1, 1, 1]} : vector<3x96x32xbf16> to vector<1x96x32xbf16>
    %45 = vector.shape_cast %44 : vector<1x96x32xbf16> to vector<96x32xbf16>
    %cst_18 = arith.constant dense<0.000000e+00> : vector<128x32xf32>
    %46 = tpu.matmul %43, %45, %cst_18 {dimension_numbers = #tpu.dot_dimension_numbers<[1], [0], [0], [1], [0, 0, 1, 1], [], []>} : vector<128x96xbf16>, vector<96x32xbf16>, vector<128x32xf32> -> vector<128x32xf32>
    %47 = arith.addf %41, %46 : vector<128x32xf32>
    %48 = vector.extract_strided_slice %35 {offsets = [2, 0, 0], sizes = [8, 16, 96], strides = [1, 1, 1]} : vector<10x16x96xbf16> to vector<8x16x96xbf16>
    %49 = vector.shape_cast %48 : vector<8x16x96xbf16> to vector<128x96xbf16>
    %50 = vector.extract_strided_slice %36 {offsets = [2, 0, 0], sizes = [1, 96, 32], strides = [1, 1, 1]} : vector<3x96x32xbf16> to vector<1x96x32xbf16>
    %51 = vector.shape_cast %50 : vector<1x96x32xbf16> to vector<96x32xbf16>
    %cst_19 = arith.constant dense<0.000000e+00> : vector<128x32xf32>
    %52 = tpu.matmul %49, %51, %cst_19 {dimension_numbers = #tpu.dot_dimension_numbers<[1], [0], [0], [1], [0, 0, 1, 1], [], []>} : vector<128x96xbf16>, vector<96x32xbf16>, vector<128x32xf32> -> vector<128x32xf32>
    %53 = arith.addf %47, %52 : vector<128x32xf32>
    %c0_20 = arith.constant 0 : index
    %c0_21 = arith.constant 0 : index
    %54 = vector.load %arg7[%c0_20, %c0_21] : memref<1x32xf32, #tpu.memory_space<vmem>>, vector<1x32xf32>
    %55 = vector.broadcast %54 : vector<1x32xf32> to vector<128x32xf32>
    %56 = arith.addf %53, %55 : vector<128x32xf32>
    %cst_22 = arith.constant 0.000000e+00 : f32
    %57 = vector.broadcast %cst_22 : f32 to vector<128x32xf32>
    %58 = arith.maximumf %56, %57 : vector<128x32xf32>
    %59 = arith.truncf %58 : vector<128x32xf32> to vector<128x32xbf16>
    %c0_23 = arith.constant 0 : index
    %c0_24 = arith.constant 0 : index
    %60 = vector.load %arg5[%c0_23, %c0_24] : memref<32x128xbf16, #tpu.memory_space<vmem>>, vector<32x128xbf16>
    %cst_25 = arith.constant dense<0.000000e+00> : vector<128x128xf32>
    %61 = tpu.matmul %59, %60, %cst_25 {dimension_numbers = #tpu.dot_dimension_numbers<[1], [0], [0], [1], [0, 0, 1, 1], [], []>} : vector<128x32xbf16>, vector<32x128xbf16>, vector<128x128xf32> -> vector<128x128xf32>
    %c0_26 = arith.constant 0 : index
    %c0_27 = arith.constant 0 : index
    %62 = vector.load %arg8[%c0_26, %c0_27] : memref<1x128xf32, #tpu.memory_space<vmem>>, vector<1x128xf32>
    %63 = vector.broadcast %62 : vector<1x128xf32> to vector<128x128xf32>
    %64 = arith.addf %61, %63 : vector<128x128xf32>
    %c1 = arith.constant 1 : index
    %c0_28 = arith.constant 0 : index
    %c0_29 = arith.constant 0 : index
    %65 = vector.load %arg10[%c1, %c0_28, %c0_29] : memref<10x16x128xf32, #tpu.memory_space<vmem>>, vector<8x16x128xf32>
    %66 = vector.shape_cast %65 : vector<8x16x128xf32> to vector<128x128xf32>
    %67 = arith.addf %64, %66 : vector<128x128xf32>
    %cst_30 = arith.constant 0.000000e+00 : f32
    %68 = vector.broadcast %cst_30 : f32 to vector<128x128xf32>
    %69 = arith.maximumf %67, %68 : vector<128x128xf32>
    %70 = vector.shape_cast %69 : vector<128x128xf32> to vector<1x8x16x128xf32>
    %c0_31 = arith.constant 0 : index
    %c0_32 = arith.constant 0 : index
    %c0_33 = arith.constant 0 : index
    %c0_34 = arith.constant 0 : index
    %71 = vector.load %arg9[%c0_31, %c0_32, %c0_33, %c0_34] : memref<1x8x16x128xf32, #tpu.memory_space<vmem>>, vector<1x8x16x128xf32>
    tpu.vector_store %arg9[%c0_31, %c0_32, %c0_33, %c0_34], %70 {strides = array<i32>} : memref<1x8x16x128xf32, #tpu.memory_space<vmem>>, vector<1x8x16x128xf32>,
    return
  }
  func.func @transform_1(%arg0: i32, %arg1: i32) -> (i32, i32) {
    %c0_i32 = arith.constant 0 : i32
    %c0_i32_0 = arith.constant 0 : i32
    %c0_i32_1 = arith.constant 0 : i32
    return %c0_i32, %c0_i32_0 : i32, i32
  }
  func.func @transform_2(%arg0: i32, %arg1: i32) -> (i32, i32, i32) {
    %c0_i32 = arith.constant 0 : i32
    %c0_i32_0 = arith.constant 0 : i32
    %c0_i32_1 = arith.constant 0 : i32
    %c0_i32_2 = arith.constant 0 : i32
    return %c0_i32, %c0_i32_0, %c0_i32_1 : i32, i32, i32
  }
  func.func @transform_3(%arg0: i32, %arg1: i32) -> (i32, i32) {
    %c0_i32 = arith.constant 0 : i32
    %c0_i32_0 = arith.constant 0 : i32
    %c0_i32_1 = arith.constant 0 : i32
    return %c0_i32, %c0_i32_0 : i32, i32
  }
  func.func @transform_4(%arg0: i32, %arg1: i32) -> (i32, i32) {
    %c0_i32 = arith.constant 0 : i32
    %c0_i32_0 = arith.constant 0 : i32
    %c0_i32_1 = arith.constant 0 : i32
    return %c0_i32, %c0_i32_0 : i32, i32
  }
  func.func @transform_5(%arg0: i32, %arg1: i32) -> (i32, i32) {
    %c0_i32 = arith.constant 0 : i32
    %c0_i32_0 = arith.constant 0 : i32
    %c0_i32_1 = arith.constant 0 : i32
    return %c0_i32, %c0_i32_0 : i32, i32
  }
  func.func @transform_6(%arg0: i32, %arg1: i32) -> (i32, i32) {
    %c0_i32 = arith.constant 0 : i32
    %c0_i32_0 = arith.constant 0 : i32
    %c0_i32_1 = arith.constant 0 : i32
    return %c0_i32, %c0_i32_0 : i32, i32
  }
  func.func @transform_7(%arg0: i32, %arg1: i32) -> (i32, i32, i32, i32) {
    %c0_i32 = arith.constant 0 : i32
    %c0_i32_0 = arith.constant 0 : i32
    %c0_i32_1 = arith.constant 0 : i32
    return %arg0, %arg1, %c0_i32, %c0_i32_0 : i32, i32, i32, i32
  }
}

</mosaic_0001>

<llo_original>
// kernel: tpu_custom_call.1
$region0: #{tpu_custom_call.1}
  #allocation0 [shape = 'u32[]', space=smem, size = 0x4, offset = 0x4, fixed_abs, tag = 'smem constant byte address 0x4 - core index']
  #allocation1 [shape = 'u32[144,128]{1,0:T(1,128)}', space=vmem, size = 0x12000, scoped, tag = 'internal scratch']
  #allocation2 [shape = 'f32[10,16,128]{2,1,0:T(8,128)}', space=vmem, size = 0x14000, scoped, tag = 'scratch operand']
  #allocation3 [shape = 's32[1]{0}', space=sflag, size = 0x4, scoped, tag = 'scratch operand']
  #allocation6 [shape = 's32[]', space=sflag, size = 0x4, offset = 0, fixed_abs, tag = 'sflag constant byte address 0x0 - dummy sync flag']
  #allocation7 [shape = 's32[]', space=sflag, size = 0x4, offset = 0, fixed_abs, tag = 'sflag constant byte address 0x0 - dummy sync flag']
  #allocation8 [shape = 'u32[]', space=smem, size = 0x4, offset = 0x44, fixed_abs, tag = 'smem constant byte address 0x44 - assertion arg 0']
  #allocation9 [shape = 'u32[]', space=smem, size = 0x4, offset = 0x48, fixed_abs, tag = 'smem constant byte address 0x48 - assertion arg 1']
  %s0 = inlined_call_operand.hbm [shape: f32[2,18,16,128], index: 0, kind: input, shape index: {}]
  %s1 = inlined_call_operand.vmem [shape: bf16[128,32], index: 1, kind: input, shape index: {}]
  %s2 = inlined_call_operand.vmem [shape: bf16[3,96,32], index: 2, kind: input, shape index: {}]
  %s3 = inlined_call_operand.vmem [shape: bf16[32,128], index: 3, kind: input, shape index: {}]
  %s4 = inlined_call_operand.vmem [shape: f32[1,32], index: 4, kind: input, shape index: {}]
  %s5 = inlined_call_operand.vmem [shape: f32[1,32], index: 5, kind: input, shape index: {}]
  %s6 = inlined_call_operand.vmem [shape: f32[1,128], index: 6, kind: input, shape index: {}]
  %s7 = inlined_call_operand.hbm [shape: f32[2,16,16,128], index: 7, kind: output, shape index: {}]
  %s8 = sld [smem:[#allocation0]]
  $region61: #{tpu_custom_call.1} parent=0
    _
  %s10 = ssub.s32 1, %s8
  %s11 = scalar_select 0, %s10, %s8
  $region1: #{tpu_custom_call.1} parent=0
    #allocation4 [shape = 'u8[131072]{0}', space=vmem, size = 0x20000, scoped, tag = 'output window, operand 0']
    #allocation5 [shape = 's32[2]{0}', space=sflag, size = 0x8, scoped, tag = 'scoped memory for tpu_custom_call.1']
    %12 = vsyncpa [#allocation5], 0
    %s13 = scalar_lea.sflag [#allocation5], 1
    %14 = vsyncpa %s13, 0
    loop: start=0, step=1, limit=6
    $region2: #{tpu_custom_call.1} parent=1 // loop_pre_header
      _
    $region3: #{tpu_custom_call.1} parent=1 // loop_header
      %s16 = sphi 0, %s20
      %p17 = scmp.ge.s32.totalorder %s16, 6
      %s23 = sphi 0, %s35
      %s24 = sphi 0, %s31
      %s25 = sphi 0, %s23
      %s26 = sphi 0, %s24
      %s27 = sphi 0, %s25
      %s28 = sphi 0, %s26
      %s36 = sphi 0, %s36
      %s38 = sphi 0, %s36
      %s39 = sphi 0, %s38
      %s53 = sphi 0, %s39
      %s57 = sphi 0, %s57
      %s59 = sphi 0, %s57
      %s60 = sphi 0, %s59
      %s74 = sphi 0, %s60
      %s78 = sphi 0, %s78
      %s80 = sphi 0, %s78
      %s81 = sphi 0, %s80
      %s95 = sphi 0, %s81
      %s99 = sphi 0, %s99
      %s101 = sphi 0, %s99
      %s102 = sphi 0, %s101
      %s116 = sphi 0, %s102
      %s120 = sphi 0, %s120
      %s122 = sphi 0, %s120
      %s123 = sphi 0, %s122
      %s137 = sphi 0, %s123
      %s141 = sphi 0, %s141
      %s143 = sphi 0, %s141
      %s144 = sphi 0, %s143
      %s158 = sphi 0, %s144
      %s166 = sphi 0, %s168
      %s169 = sphi 0, %s166
      %s170 = sphi 0, %s169
      %s186 = sphi 0, %s170
    $region4: #{tpu_custom_call.1} parent=1 // loop_header_branch
      %19 = sbr.rel (%p17) target = $region8
    $region5: #{tpu_custom_call.1} parent=1 // loop_body
      %s21 = ssub.s32 %s16, 1
      %s22 = ssub.s32 %s16, 2
      %s29 = sadd.s32 1, %s24
      %p30 = scmp.ge.s32.totalorder %s29, 2
      %s31 = scalar_select %p30, 0, %s29
      %s32 = sadd.s32 1, %s23
      %s33 = scalar_select %p30, %s32, %s23
      %p34 = scmp.ge.s32.totalorder %s33, 2
      %s35 = scalar_select %p34, 0, %s33
      %s37 = sadd.s32 %s36, 1
      %p40 = scmp.eq.s32.totalorder %s16, 3
      %p41 = scmp.ne.s32.totalorder %s36, %s38
      %p42 = scmp.eq.s32.totalorder %s16, 0
      %p43 = por %p41, %p42
      %p44 = scmp.ne.s32.totalorder %s36, %s38
      %p45 = scmp.eq.s32.totalorder %s21, 3
      %p46 = por %p44, %p45
      %p47 = scmp.ne.s32.totalorder %s38, %s39
      %p48 = scmp.eq.s32.totalorder %s21, 0
      %p49 = por %p47, %p48
      %p50 = scmp.ne.s32.totalorder %s38, %s39
      %p51 = scmp.eq.s32.totalorder %s22, 3
      %p52 = por %p50, %p51
      %p54 = scmp.ne.s32.totalorder %s39, %s53
      %p55 = scmp.eq.s32.totalorder %s22, 0
      %p56 = por %p54, %p55
      %s58 = sadd.s32 %s57, 1
      %p61 = scmp.eq.s32.totalorder %s16, 3
      %p62 = scmp.ne.s32.totalorder %s57, %s59
      %p63 = scmp.eq.s32.totalorder %s16, 0
      %p64 = por %p62, %p63
      %p65 = scmp.ne.s32.totalorder %s57, %s59
      %p66 = scmp.eq.s32.totalorder %s21, 3
      %p67 = por %p65, %p66
      %p68 = scmp.ne.s32.totalorder %s59, %s60
      %p69 = scmp.eq.s32.totalorder %s21, 0
      %p70 = por %p68, %p69
      %p71 = scmp.ne.s32.totalorder %s59, %s60
      %p72 = scmp.eq.s32.totalorder %s22, 3
      %p73 = por %p71, %p72
      %p75 = scmp.ne.s32.totalorder %s60, %s74
      %p76 = scmp.eq.s32.totalorder %s22, 0
      %p77 = por %p75, %p76
      %s79 = sadd.s32 %s78, 1
      %p82 = scmp.eq.s32.totalorder %s16, 3
      %p83 = scmp.ne.s32.totalorder %s78, %s80
      %p84 = scmp.eq.s32.totalorder %s16, 0
      %p85 = por %p83, %p84
      %p86 = scmp.ne.s32.totalorder %s78, %s80
      %p87 = scmp.eq.s32.totalorder %s21, 3
      %p88 = por %p86, %p87
      %p89 = scmp.ne.s32.totalorder %s80, %s81
      %p90 = scmp.eq.s32.totalorder %s21, 0
      %p91 = por %p89, %p90
      %p92 = scmp.ne.s32.totalorder %s80, %s81
      %p93 = scmp.eq.s32.totalorder %s22, 3
      %p94 = por %p92, %p93
      %p96 = scmp.ne.s32.totalorder %s81, %s95
      %p97 = scmp.eq.s32.totalorder %s22, 0
      %p98 = por %p96, %p97
      %s100 = sadd.s32 %s99, 1
      %p103 = scmp.eq.s32.totalorder %s16, 3
      %p104 = scmp.ne.s32.totalorder %s99, %s101
      %p105 = scmp.eq.s32.totalorder %s16, 0
      %p106 = por %p104, %p105
      %p107 = scmp.ne.s32.totalorder %s99, %s101
      %p108 = scmp.eq.s32.totalorder %s21, 3
      %p109 = por %p107, %p108
      %p110 = scmp.ne.s32.totalorder %s101, %s102
      %p111 = scmp.eq.s32.totalorder %s21, 0
      %p112 = por %p110, %p111
      %p113 = scmp.ne.s32.totalorder %s101, %s102
      %p114 = scmp.eq.s32.totalorder %s22, 3
      %p115 = por %p113, %p114
      %p117 = scmp.ne.s32.totalorder %s102, %s116
      %p118 = scmp.eq.s32.totalorder %s22, 0
      %p119 = por %p117, %p118
      %s121 = sadd.s32 %s120, 1
      %p124 = scmp.eq.s32.totalorder %s16, 3
      %p125 = scmp.ne.s32.totalorder %s120, %s122
      %p126 = scmp.eq.s32.totalorder %s16, 0
      %p127 = por %p125, %p126
      %p128 = scmp.ne.s32.totalorder %s120, %s122
      %p129 = scmp.eq.s32.totalorder %s21, 3
      %p130 = por %p128, %p129
      %p131 = scmp.ne.s32.totalorder %s122, %s123
      %p132 = scmp.eq.s32.totalorder %s21, 0
      %p133 = por %p131, %p132
      %p134 = scmp.ne.s32.totalorder %s122, %s123
      %p135 = scmp.eq.s32.totalorder %s22, 3
      %p136 = por %p134, %p135
      %p138 = scmp.ne.s32.totalorder %s123, %s137
      %p139 = scmp.eq.s32.totalorder %s22, 0
      %p140 = por %p138, %p139
      %s142 = sadd.s32 %s141, 1
      %p145 = scmp.eq.s32.totalorder %s16, 3
      %p146 = scmp.ne.s32.totalorder %s141, %s143
      %p147 = scmp.eq.s32.totalorder %s16, 0
      %p148 = por %p146, %p147
      %p149 = scmp.ne.s32.totalorder %s141, %s143
      %p150 = scmp.eq.s32.totalorder %s21, 3
      %p151 = por %p149, %p150
      %p152 = scmp.ne.s32.totalorder %s143, %s144
      %p153 = scmp.eq.s32.totalorder %s21, 0
      %p154 = por %p152, %p153
      %p155 = scmp.ne.s32.totalorder %s143, %s144
      %p156 = scmp.eq.s32.totalorder %s22, 3
      %p157 = por %p155, %p156
      %p159 = scmp.ne.s32.totalorder %s144, %s158
      %p160 = scmp.eq.s32.totalorder %s22, 0
      %p161 = por %p159, %p160
      %s162 = ssub.s32 %s23, %s35
      %s163 = ssub.s32 %s24, %s31
      %s164 = sor.u32 %s162, %s163
      %p165 = scmp.eq.s32.totalorder %s164, 0
      %s167 = sadd.s32 %s166, 1
      %s168 = scalar_select %p165, %s166, %s167
      %p171 = pneg %p165
      %p172 = scmp.eq.s32.totalorder %s16, 3
      %p173 = por %p171, %p172
      %p174 = scmp.ne.s32.totalorder %s166, %s169
      %p175 = scmp.eq.s32.totalorder %s16, 0
      %p176 = por %p174, %p175
      %p177 = scmp.ne.s32.totalorder %s166, %s169
      %p178 = scmp.eq.s32.totalorder %s21, 3
      %p179 = por %p177, %p178
      %p180 = scmp.ne.s32.totalorder %s169, %s170
      %p181 = scmp.eq.s32.totalorder %s21, 0
      %p182 = por %p180, %p181
      %p183 = scmp.ne.s32.totalorder %s169, %s170
      %p184 = scmp.eq.s32.totalorder %s22, 3
      %p185 = por %p183, %p184
      %p187 = scmp.ne.s32.totalorder %s170, %s186
      %p188 = scmp.eq.s32.totalorder %s22, 0
      %p189 = por %p187, %p188
      %p190 = scmp.le.s32.totalorder 1, %s16
      %p191 = scmp.lt.s32.totalorder %s16, 5
      %p192 = pnand %p190, %p191
      %p193 = pneg %p192
      // Predicated region
      $region9: #{tpu_custom_call.1} parent=5 // pred_check
        _
      $region10: #{tpu_custom_call.1} parent=5 // pred_check_branch
        %195 = sbr.rel (%p192) target = $region12
      $region11: #{tpu_custom_call.1} parent=5 // pred_region
        %s196 = ssub.s32 %s16, 1
        // Predicated region
        $region13: #{tpu_custom_call.1} parent=11 // pred_check
          %p197 = pneg %p49
        $region14: #{tpu_custom_call.1} parent=11 // pred_check_branch
          %199 = sbr.rel (%p197) target = $region16
        $region15: #{tpu_custom_call.1} parent=11 // pred_region
          _
        $region16: #{tpu_custom_call.1} parent=11 // pred_fallthru
          _
        // Predicated region
        $region17: #{tpu_custom_call.1} parent=11 // pred_check
          %p200 = pneg %p70
        $region18: #{tpu_custom_call.1} parent=11 // pred_check_branch
          %202 = sbr.rel (%p200) target = $region20
        $region19: #{tpu_custom_call.1} parent=11 // pred_region
          _
        $region20: #{tpu_custom_call.1} parent=11 // pred_fallthru
          _
        // Predicated region
        $region21: #{tpu_custom_call.1} parent=11 // pred_check
          %p203 = pneg %p91
        $region22: #{tpu_custom_call.1} parent=11 // pred_check_branch
          %205 = sbr.rel (%p203) target = $region24
        $region23: #{tpu_custom_call.1} parent=11 // pred_region
          _
        $region24: #{tpu_custom_call.1} parent=11 // pred_fallthru
          _
        // Predicated region
        $region25: #{tpu_custom_call.1} parent=11 // pred_check
          %p206 = pneg %p112
        $region26: #{tpu_custom_call.1} parent=11 // pred_check_branch
          %208 = sbr.rel (%p206) target = $region28
        $region27: #{tpu_custom_call.1} parent=11 // pred_region
          _
        $region28: #{tpu_custom_call.1} parent=11 // pred_fallthru
          _
        // Predicated region
        $region29: #{tpu_custom_call.1} parent=11 // pred_check
          %p209 = pneg %p133
        $region30: #{tpu_custom_call.1} parent=11 // pred_check_branch
          %211 = sbr.rel (%p209) target = $region32
        $region31: #{tpu_custom_call.1} parent=11 // pred_region
          _
        $region32: #{tpu_custom_call.1} parent=11 // pred_fallthru
          _
        // Predicated region
        $region33: #{tpu_custom_call.1} parent=11 // pred_check
          %p212 = pneg %p154
        $region34: #{tpu_custom_call.1} parent=11 // pred_check_branch
          %214 = sbr.rel (%p212) target = $region36
        $region35: #{tpu_custom_call.1} parent=11 // pred_region
          _
        $region36: #{tpu_custom_call.1} parent=11 // pred_fallthru
          _
      $region12: #{tpu_custom_call.1} parent=5 // pred_fallthru
        _
      %p215 = scmp.lt.s32.totalorder %s16, 4
      // Predicated region
      $region37: #{tpu_custom_call.1} parent=5 // pred_check
        %p216 = pneg %p215
      $region38: #{tpu_custom_call.1} parent=5 // pred_check_branch
        %218 = sbr.rel (%p216) target = $region40
      $region39: #{tpu_custom_call.1} parent=5 // pred_region
        _
      $region40: #{tpu_custom_call.1} parent=5 // pred_fallthru
        _
      %p219 = scmp.le.s32.totalorder 1, %s16
      %p220 = scmp.lt.s32.totalorder %s16, 5
      %p221 = pnand %p219, %p220
      %p222 = pneg %p221
      // Predicated region
      $region41: #{tpu_custom_call.1} parent=5 // pred_check
        _
      $region42: #{tpu_custom_call.1} parent=5 // pred_check_branch
        %224 = sbr.rel (%p221) target = $region44
      $region43: #{tpu_custom_call.1} parent=5 // pred_region
        %s225 = ssub.s32 %s16, 1
        %p226 = pneg %p49
        %p227 = pneg %p46
        %p228 = pneg %p70
        %p229 = pneg %p67
        %p230 = pneg %p91
        %p231 = pneg %p88
        %p232 = pneg %p112
        %p233 = pneg %p109
        %p234 = pneg %p133
        %p235 = pneg %p130
        %p236 = pneg %p154
        %p237 = pneg %p151
        %p238 = pneg %p182
        %p239 = pneg %p179
        %s240 = sand.u32 %s169, 1
        %s241 = scalar_lea.sflag [#allocation5], %s240
        %s242 = sand.u32 %s169, 1
        %s243 = smul.addr %s242, 128
        %s244 = scalar_lea.vmem [#allocation4], %s243
        %s245 = smul.u32 8, %s26
        %s247 = smul.u32 %s26, 8
        %s248 = smul.u32 %s247, 16
        %s249 = smul.u32 %s25, 288
        %s250 = sadd.s32 %s248, %s249
        %s251 = smul.addr %s250, 16
        %s252 = scalar_lea.hbm %s0, %s251
        // Predicated region
        $region45: #{tpu_custom_call.1} parent=43 // pred_check
          _
        $region46: #{tpu_custom_call.1} parent=43 // pred_check_branch
          %254 = sbr.rel target = $region48
        $region47: #{tpu_custom_call.1} parent=43 // pred_region
          %255 = sst [smem:[#allocation8]] [#allocation7]
          %256 = sst [smem:[#allocation9]] [#allocation6]
        $region48: #{tpu_custom_call.1} parent=43 // pred_fallthru
          _
        %258 = shalt.err (0)
        %s260 = sshll.u32 [#allocation2], 4
        %s261 = int_to_ptr.vmem [resolvable:$true] %s260
        %263 = dma.hbm_to_vmem [thread:$0]  %s252, 2560, %s261, [#allocation3]
        %s264 = smul.u32 10, 16
        %s265 = smul.u32 %s264, 1
        %s266 = sshll.u32 %s265, 4
        %267 = dma.done [#allocation3], %s266
        %v268 = vld [vmem:[#allocation2] sm:$0xff]
        %v269 = vld [vmem:[#allocation2 + $0x8] sm:$0xff]
        %v270 = vld [vmem:[#allocation2 + $0x10] sm:$0xff]
        %v271 = vld [vmem:[#allocation2 + $0x18] sm:$0xff]
        %v272 = vld [vmem:[#allocation2 + $0x20] sm:$0xff]
        %v273 = vld [vmem:[#allocation2 + $0x28] sm:$0xff]
        %v274 = vld [vmem:[#allocation2 + $0x30] sm:$0xff]
        %v275 = vld [vmem:[#allocation2 + $0x38] sm:$0xff]
        %v276 = vld [vmem:[#allocation2 + $0x40] sm:$0xff]
        %v277 = vld [vmem:[#allocation2 + $0x48] sm:$0xff]
        %v278 = vld [vmem:[#allocation2 + $0x50] sm:$0xff]
        %v279 = vld [vmem:[#allocation2 + $0x58] sm:$0xff]
        %v280 = vld [vmem:[#allocation2 + $0x60] sm:$0xff]
        %v281 = vld [vmem:[#allocation2 + $0x68] sm:$0xff]
        %v282 = vld [vmem:[#allocation2 + $0x70] sm:$0xff]
        %v283 = vld [vmem:[#allocation2 + $0x78] sm:$0xff]
        %v284 = vld [vmem:[#allocation2 + $0x80] sm:$0xff]
        %v285 = vld [vmem:[#allocation2 + $0x88] sm:$0xff]
        %v286 = vld [vmem:[#allocation2 + $0x90] sm:$0xff]
        %v287 = vld [vmem:[#allocation2 + $0x98] sm:$0xff]
        %v288 = vpack.c.bf16 %v269, %v268
        %v289 = vpack.c.bf16 %v271, %v270
        %v290 = vpack.c.bf16 %v273, %v272
        %v291 = vpack.c.bf16 %v275, %v274
        %v292 = vpack.c.bf16 %v277, %v276
        %v293 = vpack.c.bf16 %v279, %v278
        %v294 = vpack.c.bf16 %v281, %v280
        %v295 = vpack.c.bf16 %v283, %v282
        %v296 = vpack.c.bf16 %v285, %v284
        %v297 = vpack.c.bf16 %v287, %v286
        %v298 = vld [vmem:[%s1] sm:$0xf]
        %v299 = vld [vmem:[%s1 + $0x4] sm:$0xf]
        %v300 = vld [vmem:[%s1 + $0x8] sm:$0xf]
        %v301 = vld [vmem:[%s1 + $0xc] sm:$0xf]
        %v302 = vld [vmem:[%s1 + $0x10] sm:$0xf]
        %v303 = vld [vmem:[%s1 + $0x14] sm:$0xf]
        %v304 = vld [vmem:[%s1 + $0x18] sm:$0xf]
        %v305 = vld [vmem:[%s1 + $0x1c] sm:$0xf]
        %v306 = vld [vmem:[%s1 + $0x20] sm:$0xf]
        %v307 = vld [vmem:[%s1 + $0x24] sm:$0xf]
        %v308 = vld [vmem:[%s1 + $0x28] sm:$0xf]
        %v309 = vld [vmem:[%s1 + $0x2c] sm:$0xf]
        %v310 = vld [vmem:[%s1 + $0x30] sm:$0xf]
        %v311 = vld [vmem:[%s1 + $0x34] sm:$0xf]
        %v312 = vld [vmem:[%s1 + $0x38] sm:$0xf]
        %v313 = vld [vmem:[%s1 + $0x3c] sm:$0xf]
        %v314 = vld [vmem:[%s4] sm:$0x1]
        %v316 = vlaneseq
        %v317 = vshrl.u32 %v316, 7
        %v318 = vsub.s32 0, %v317
        %v319 = vrot.slane %v314, %v318
        %v337 = vunpack.c.l.b16 %v298
        %v338 = vunpack.c.l.b16 %v299
        %v339 = vunpack.c.l.b16 %v300
        %v340 = vunpack.c.l.b16 %v301
        %v341 = vunpack.c.l.b16 %v302
        %v342 = vunpack.c.l.b16 %v303
        %v343 = vunpack.c.l.b16 %v304
        %v344 = vunpack.c.l.b16 %v305
        %v345 = vunpack.c.l.b16 %v306
        %v346 = vunpack.c.l.b16 %v307
        %v347 = vunpack.c.l.b16 %v308
        %v348 = vunpack.c.l.b16 %v309
        %v349 = vunpack.c.l.b16 %v310
        %v350 = vunpack.c.l.b16 %v311
        %v351 = vunpack.c.l.b16 %v312
        %v352 = vunpack.c.l.b16 %v313
        %v353 = vpack.c.b16 %v338, %v337
        %v354 = vpack.c.b16 %v340, %v339
        %v355 = vpack.c.b16 %v342, %v341
        %v356 = vpack.c.b16 %v344, %v343
        %v357 = vpack.c.b16 %v346, %v345
        %v358 = vpack.c.b16 %v348, %v347
        %v359 = vpack.c.b16 %v350, %v349
        %v360 = vpack.c.b16 %v352, %v351
        %369 = vmatprep.subr.bf16.mxu0 0
        %370 = vmatpush1.bf16.msra.mxu0 %v360
        %371 = vmatprep.subr.bf16.mxu0 0
        %372 = vmatpush1.bf16.msra.mxu0 %v359
        %373 = vmatprep.subr.bf16.mxu0 0
        %374 = vmatpush1.bf16.msra.mxu0 %v358
        %375 = vmatprep.subr.bf16.mxu0 0
        %376 = vmatpush1.bf16.msra.mxu0 %v357
        %377 = vmatprep.subr.bf16.mxu0 0
        %378 = vmatpush1.bf16.msra.mxu0 %v356
        %379 = vmatprep.subr.bf16.mxu0 0
        %380 = vmatpush1.bf16.msra.mxu0 %v355
        %381 = vmatprep.subr.bf16.mxu0 0
        %382 = vmatpush1.bf16.msra.mxu0 %v354
        %383 = vmatprep.subr.bf16.mxu0 0
        %384 = vmatpush1.bf16.msra.mxu0 %v353
        %385 = vmatprep.subr.bf16.mxu0 0
        %386 = vmatpush2.bf16.msra.mxu0 0
        %387 = vmatprep.subr.bf16.mxu0 0
        %388 = vmatpush2.bf16.msra.mxu0 0
        %389 = vmatprep.subr.bf16.mxu0 0
        %390 = vmatpush2.bf16.msra.mxu0 0
        %391 = vmatprep.subr.bf16.mxu0 0
        %392 = vmatpush2.bf16.msra.mxu0 0
        %393 = vmatprep.subr.bf16.mxu0 0
        %394 = vmatpush2.bf16.msra.mxu0 0
        %395 = vmatprep.subr.bf16.mxu0 0
        %396 = vmatpush2.bf16.msra.mxu0 0
        %397 = vmatprep.subr.bf16.mxu0 0
        %398 = vmatpush2.bf16.msra.mxu0 0
        %399 = vmatprep.subr.bf16.mxu0 0
        %400 = vmatpush2.bf16.msra.mxu0 0
        %401 = vmatprep.mubr.bf16.mxu0 0
        %402 = vmatmul.mubr.bf16.gmra.mxu0 %v288
        %v403 = vpop.f32.mrf.mxu0
        %v404 = vadd.f32 %v319, %v403
        %v405 = vpop.f32.mrf.mxu0
        %v406 = vpop.f32.mrf.mxu0
        %v407 = vadd.f32 %v319, %v406
        %v408 = vpop.f32.mrf.mxu0
        %409 = vmatprep.mubr.bf16.mxu0 0
        %410 = vmatmul.mubr.bf16.gmra.mxu0 %v289
        %v411 = vpop.f32.mrf.mxu0
        %v412 = vadd.f32 %v319, %v411
        %v413 = vpop.f32.mrf.mxu0
        %v414 = vpop.f32.mrf.mxu0
        %v415 = vadd.f32 %v319, %v414
        %v416 = vpop.f32.mrf.mxu0
        %417 = vmatprep.mubr.bf16.mxu0 0
        %418 = vmatmul.mubr.bf16.gmra.mxu0 %v290
        %v419 = vpop.f32.mrf.mxu0
        %v420 = vadd.f32 %v319, %v419
        %v421 = vpop.f32.mrf.mxu0
        %v422 = vpop.f32.mrf.mxu0
        %v423 = vadd.f32 %v319, %v422
        %v424 = vpop.f32.mrf.mxu0
        %425 = vmatprep.mubr.bf16.mxu0 0
        %426 = vmatmul.mubr.bf16.gmra.mxu0 %v291
        %v427 = vpop.f32.mrf.mxu0
        %v428 = vadd.f32 %v319, %v427
        %v429 = vpop.f32.mrf.mxu0
        %v430 = vpop.f32.mrf.mxu0
        %v431 = vadd.f32 %v319, %v430
        %v432 = vpop.f32.mrf.mxu0
        %433 = vmatprep.mubr.bf16.mxu0 0
        %434 = vmatmul.mubr.bf16.gmra.mxu0 %v292
        %v435 = vpop.f32.mrf.mxu0
        %v436 = vadd.f32 %v319, %v435
        %v437 = vpop.f32.mrf.mxu0
        %v438 = vpop.f32.mrf.mxu0
        %v439 = vadd.f32 %v319, %v438
        %v440 = vpop.f32.mrf.mxu0
        %441 = vmatprep.mubr.bf16.mxu0 0
        %442 = vmatmul.mubr.bf16.gmra.mxu0 %v293
        %v443 = vpop.f32.mrf.mxu0
        %v444 = vadd.f32 %v319, %v443
        %v445 = vpop.f32.mrf.mxu0
        %v446 = vpop.f32.mrf.mxu0
        %v447 = vadd.f32 %v319, %v446
        %v448 = vpop.f32.mrf.mxu0
        %449 = vmatprep.mubr.bf16.mxu0 0
        %450 = vmatmul.mubr.bf16.gmra.mxu0 %v294
        %v451 = vpop.f32.mrf.mxu0
        %v452 = vadd.f32 %v319, %v451
        %v453 = vpop.f32.mrf.mxu0
        %v454 = vpop.f32.mrf.mxu0
        %v455 = vadd.f32 %v319, %v454
        %v456 = vpop.f32.mrf.mxu0
        %457 = vmatprep.mubr.bf16.mxu0 0
        %458 = vmatmul.mubr.bf16.gmra.mxu0 %v295
        %v459 = vpop.f32.mrf.mxu0
        %v460 = vadd.f32 %v319, %v459
        %v461 = vpop.f32.mrf.mxu0
        %v462 = vpop.f32.mrf.mxu0
        %v463 = vadd.f32 %v319, %v462
        %v464 = vpop.f32.mrf.mxu0
        %465 = vmatprep.mubr.bf16.mxu0 0
        %466 = vmatmul.mubr.bf16.gmra.mxu0 %v296
        %v467 = vpop.f32.mrf.mxu0
        %v468 = vadd.f32 %v319, %v467
        %v469 = vpop.f32.mrf.mxu0
        %v470 = vpop.f32.mrf.mxu0
        %v471 = vadd.f32 %v319, %v470
        %v472 = vpop.f32.mrf.mxu0
        %473 = vmatprep.mubr.bf16.mxu0 0
        %474 = vmatmul.mubr.bf16.gmra.mxu0 %v297
        %v475 = vpop.f32.mrf.mxu0
        %v476 = vadd.f32 %v319, %v475
        %v477 = vpop.f32.mrf.mxu0
        %v478 = vpop.f32.mrf.mxu0
        %v479 = vadd.f32 %v319, %v478
        %v480 = vpop.f32.mrf.mxu0
        %481 = vdwg.mxu0
        %v482 = vmax.f32 %v404, 0.0
        %v483 = vmax.f32 %v407, 0.0
        %v484 = vmax.f32 %v412, 0.0
        %v485 = vmax.f32 %v415, 0.0
        %v486 = vmax.f32 %v420, 0.0
        %v487 = vmax.f32 %v423, 0.0
        %v488 = vmax.f32 %v428, 0.0
        %v489 = vmax.f32 %v431, 0.0
        %v490 = vmax.f32 %v436, 0.0
        %v491 = vmax.f32 %v439, 0.0
        %v492 = vmax.f32 %v444, 0.0
        %v493 = vmax.f32 %v447, 0.0
        %v494 = vmax.f32 %v452, 0.0
        %v495 = vmax.f32 %v455, 0.0
        %v496 = vmax.f32 %v460, 0.0
        %v497 = vmax.f32 %v463, 0.0
        %v498 = vmax.f32 %v468, 0.0
        %v499 = vmax.f32 %v471, 0.0
        %v500 = vmax.f32 %v476, 0.0
        %v501 = vmax.f32 %v479, 0.0
        %s502 = ssub.s32 %s247, 1
        %v503 = vstv %s502
        %v504 = vadd.s32 %v503, 1
        %v505 = vadd.s32 %v503, 2
        %v506 = vadd.s32 %v503, 3
        %v507 = vadd.s32 %v503, 4
        %v508 = vadd.s32 %v503, 5
        %v509 = vadd.s32 %v503, 6
        %v510 = vadd.s32 %v503, 7
        %v511 = vadd.s32 %v503, 8
        %v512 = vadd.s32 %v503, 9
        %vm513 = vcmp.ge.s32.totalorder %v503, 0
        %vm514 = vcmp.ge.s32.totalorder %v504, 0
        %vm515 = vcmp.ge.s32.totalorder %v505, 0
        %vm516 = vcmp.ge.s32.totalorder %v506, 0
        %vm517 = vcmp.ge.s32.totalorder %v507, 0
        %vm518 = vcmp.ge.s32.totalorder %v508, 0
        %vm519 = vcmp.ge.s32.totalorder %v509, 0
        %vm520 = vcmp.ge.s32.totalorder %v510, 0
        %vm521 = vcmp.ge.s32.totalorder %v511, 0
        %vm522 = vcmp.ge.s32.totalorder %v512, 0
        %vm523 = vcmp.lt.s32.totalorder %v503, 16
        %vm524 = vcmp.lt.s32.totalorder %v504, 16
        %vm525 = vcmp.lt.s32.totalorder %v505, 16
        %vm526 = vcmp.lt.s32.totalorder %v506, 16
        %vm527 = vcmp.lt.s32.totalorder %v507, 16
        %vm528 = vcmp.lt.s32.totalorder %v508, 16
        %vm529 = vcmp.lt.s32.totalorder %v509, 16
        %vm530 = vcmp.lt.s32.totalorder %v510, 16
        %vm531 = vcmp.lt.s32.totalorder %v511, 16
        %vm532 = vcmp.lt.s32.totalorder %v512, 16
        %vm533 = vmand %vm513, %vm523
        %vm534 = vmand %vm514, %vm524
        %vm535 = vmand %vm515, %vm525
        %vm536 = vmand %vm516, %vm526
        %vm537 = vmand %vm517, %vm527
        %vm538 = vmand %vm518, %vm528
        %vm539 = vmand %vm519, %vm529
        %vm540 = vmand %vm520, %vm530
        %vm541 = vmand %vm521, %vm531
        %vm542 = vmand %vm522, %vm532
        %v543 = vsel %vm533, %v482, 0.0
        %v544 = vsel %vm533, %v483, 0.0
        %v545 = vsel %vm534, %v484, 0.0
        %v546 = vsel %vm534, %v485, 0.0
        %v547 = vsel %vm535, %v486, 0.0
        %v548 = vsel %vm535, %v487, 0.0
        %v549 = vsel %vm536, %v488, 0.0
        %v550 = vsel %vm536, %v489, 0.0
        %v551 = vsel %vm537, %v490, 0.0
        %v552 = vsel %vm537, %v491, 0.0
        %v553 = vsel %vm538, %v492, 0.0
        %v554 = vsel %vm538, %v493, 0.0
        %v555 = vsel %vm539, %v494, 0.0
        %v556 = vsel %vm539, %v495, 0.0
        %v557 = vsel %vm540, %v496, 0.0
        %v558 = vsel %vm540, %v497, 0.0
        %v559 = vsel %vm541, %v498, 0.0
        %v560 = vsel %vm541, %v499, 0.0
        %v561 = vsel %vm542, %v500, 0.0
        %v562 = vsel %vm542, %v501, 0.0
        %vm583 = vcmask 1040384
        %v584 = vrot.slane %v543, 7
        %v585 = vrot.slane %v544, 7
        %v586 = vsel %vm583, %v584, %v585
        %v587 = vrot.slane %v545, 7
        %v588 = vrot.slane %v546, 7
        %v589 = vsel %vm583, %v587, %v588
        %v590 = vrot.slane %v547, 7
        %v591 = vrot.slane %v548, 7
        %v592 = vsel %vm583, %v590, %v591
        %v593 = vrot.slane %v549, 7
        %v594 = vrot.slane %v550, 7
        %v595 = vsel %vm583, %v593, %v594
        %v596 = vrot.slane %v551, 7
        %v597 = vrot.slane %v552, 7
        %v598 = vsel %vm583, %v596, %v597
        %v599 = vrot.slane %v553, 7
        %v600 = vrot.slane %v554, 7
        %v601 = vsel %vm583, %v599, %v600
        %v602 = vrot.slane %v555, 7
        %v603 = vrot.slane %v556, 7
        %v604 = vsel %vm583, %v602, %v603
        %v605 = vrot.slane %v557, 7
        %v606 = vrot.slane %v558, 7
        %v607 = vsel %vm583, %v605, %v606
        %v608 = vrot.slane %v559, 7
        %v609 = vrot.slane %v560, 7
        %v610 = vsel %vm583, %v608, %v609
        %v611 = vrot.slane %v561, 7
        %v612 = vrot.slane %v562, 7
        %v613 = vsel %vm583, %v611, %v612
        %v634 = vsel %vm583, 0.0, %v584
        %v635 = vsel %vm583, 0.0, %v587
        %v636 = vsel %vm583, 0.0, %v590
        %v637 = vsel %vm583, 0.0, %v593
        %v638 = vsel %vm583, 0.0, %v596
        %v639 = vsel %vm583, 0.0, %v599
        %v640 = vsel %vm583, 0.0, %v602
        %v641 = vsel %vm583, 0.0, %v605
        %v642 = vsel %vm583, 0.0, %v608
        %v643 = vsel %vm583, 0.0, %v611
        %vm644 = vcmask 1046528
        %v645 = vrot.slane %v543, 1
        %v646 = vrot.slane %v544, 1
        %v647 = vsel %vm644, %v645, %v646
        %v648 = vrot.slane %v545, 1
        %v649 = vrot.slane %v546, 1
        %v650 = vsel %vm644, %v648, %v649
        %v651 = vrot.slane %v547, 1
        %v652 = vrot.slane %v548, 1
        %v653 = vsel %vm644, %v651, %v652
        %v654 = vrot.slane %v549, 1
        %v655 = vrot.slane %v550, 1
        %v656 = vsel %vm644, %v654, %v655
        %v657 = vrot.slane %v551, 1
        %v658 = vrot.slane %v552, 1
        %v659 = vsel %vm644, %v657, %v658
        %v660 = vrot.slane %v553, 1
        %v661 = vrot.slane %v554, 1
        %v662 = vsel %vm644, %v660, %v661
        %v663 = vrot.slane %v555, 1
        %v664 = vrot.slane %v556, 1
        %v665 = vsel %vm644, %v663, %v664
        %v666 = vrot.slane %v557, 1
        %v667 = vrot.slane %v558, 1
        %v668 = vsel %vm644, %v666, %v667
        %v669 = vrot.slane %v559, 1
        %v670 = vrot.slane %v560, 1
        %v671 = vsel %vm644, %v669, %v670
        %v672 = vrot.slane %v561, 1
        %v673 = vrot.slane %v562, 1
        %v674 = vsel %vm644, %v672, %v673
        %v685 = vsel %vm644, %v646, 0.0
        %v686 = vsel %vm644, %v649, 0.0
        %v687 = vsel %vm644, %v652, 0.0
        %v688 = vsel %vm644, %v655, 0.0
        %v689 = vsel %vm644, %v658, 0.0
        %v690 = vsel %vm644, %v661, 0.0
        %v691 = vsel %vm644, %v664, 0.0
        %v692 = vsel %vm644, %v667, 0.0
        %v693 = vsel %vm644, %v670, 0.0
        %v694 = vsel %vm644, %v673, 0.0
        %695 = vrot.lane.b32.xlu0 %v543, 32
        %v696 = vpop.permute.xlu0 %695
        %697 = vrot.lane.b32.xlu0 %v544, 32
        %v698 = vpop.permute.xlu0 %697
        %699 = vrot.lane.b32.xlu0 %v545, 32
        %v700 = vpop.permute.xlu0 %699
        %701 = vrot.lane.b32.xlu0 %v546, 32
        %v702 = vpop.permute.xlu0 %701
        %703 = vrot.lane.b32.xlu0 %v547, 32
        %v704 = vpop.permute.xlu0 %703
        %705 = vrot.lane.b32.xlu0 %v548, 32
        %v706 = vpop.permute.xlu0 %705
        %707 = vrot.lane.b32.xlu0 %v549, 32
        %v708 = vpop.permute.xlu0 %707
        %709 = vrot.lane.b32.xlu0 %v550, 32
        %v710 = vpop.permute.xlu0 %709
        %711 = vrot.lane.b32.xlu0 %v551, 32
        %v712 = vpop.permute.xlu0 %711
        %713 = vrot.lane.b32.xlu0 %v552, 32
        %v714 = vpop.permute.xlu0 %713
        %715 = vrot.lane.b32.xlu0 %v553, 32
        %v716 = vpop.permute.xlu0 %715
        %717 = vrot.lane.b32.xlu0 %v554, 32
        %v718 = vpop.permute.xlu0 %717
        %719 = vrot.lane.b32.xlu0 %v555, 32
        %v720 = vpop.permute.xlu0 %719
        %721 = vrot.lane.b32.xlu0 %v556, 32
        %v722 = vpop.permute.xlu0 %721
        %723 = vrot.lane.b32.xlu0 %v557, 32
        %v724 = vpop.permute.xlu0 %723
        %725 = vrot.lane.b32.xlu0 %v558, 32
        %v726 = vpop.permute.xlu0 %725
        %727 = vrot.lane.b32.xlu0 %v559, 32
        %v728 = vpop.permute.xlu0 %727
        %729 = vrot.lane.b32.xlu0 %v560, 32
        %v730 = vpop.permute.xlu0 %729
        %731 = vrot.lane.b32.xlu0 %v561, 32
        %v732 = vpop.permute.xlu0 %731
        %733 = vrot.lane.b32.xlu0 %v562, 32
        %v734 = vpop.permute.xlu0 %733
        %765 = vrot.lane.b32.xlu0 %v647, 64
        %v766 = vpop.permute.xlu0 %765
        %767 = vrot.lane.b32.xlu0 %v685, 64
        %v768 = vpop.permute.xlu0 %767
        %769 = vrot.lane.b32.xlu0 %v650, 64
        %v770 = vpop.permute.xlu0 %769
        %771 = vrot.lane.b32.xlu0 %v686, 64
        %v772 = vpop.permute.xlu0 %771
        %773 = vrot.lane.b32.xlu0 %v653, 64
        %v774 = vpop.permute.xlu0 %773
        %775 = vrot.lane.b32.xlu0 %v687, 64
        %v776 = vpop.permute.xlu0 %775
        %777 = vrot.lane.b32.xlu0 %v656, 64
        %v778 = vpop.permute.xlu0 %777
        %779 = vrot.lane.b32.xlu0 %v688, 64
        %v780 = vpop.permute.xlu0 %779
        %781 = vrot.lane.b32.xlu0 %v659, 64
        %v782 = vpop.permute.xlu0 %781
        %783 = vrot.lane.b32.xlu0 %v689, 64
        %v784 = vpop.permute.xlu0 %783
        %785 = vrot.lane.b32.xlu0 %v662, 64
        %v786 = vpop.permute.xlu0 %785
        %787 = vrot.lane.b32.xlu0 %v690, 64
        %v788 = vpop.permute.xlu0 %787
        %789 = vrot.lane.b32.xlu0 %v665, 64
        %v790 = vpop.permute.xlu0 %789
        %791 = vrot.lane.b32.xlu0 %v691, 64
        %v792 = vpop.permute.xlu0 %791
        %793 = vrot.lane.b32.xlu0 %v668, 64
        %v794 = vpop.permute.xlu0 %793
        %795 = vrot.lane.b32.xlu0 %v692, 64
        %v796 = vpop.permute.xlu0 %795
        %797 = vrot.lane.b32.xlu0 %v671, 64
        %v798 = vpop.permute.xlu0 %797
        %799 = vrot.lane.b32.xlu0 %v693, 64
        %v800 = vpop.permute.xlu0 %799
        %801 = vrot.lane.b32.xlu0 %v674, 64
        %v802 = vpop.permute.xlu0 %801
        %803 = vrot.lane.b32.xlu0 %v694, 64
        %v804 = vpop.permute.xlu0 %803
        %vm825 = vcmask 261120
        %v826 = vsel %vm825, %v634, %v696
        %v827 = vsel %vm825, %v586, %v698
        %v828 = vsel %vm825, %v635, %v700
        %v829 = vsel %vm825, %v589, %v702
        %v830 = vsel %vm825, %v636, %v704
        %v831 = vsel %vm825, %v592, %v706
        %v832 = vsel %vm825, %v637, %v708
        %v833 = vsel %vm825, %v595, %v710
        %v834 = vsel %vm825, %v638, %v712
        %v835 = vsel %vm825, %v598, %v714
        %v836 = vsel %vm825, %v639, %v716
        %v837 = vsel %vm825, %v601, %v718
        %v838 = vsel %vm825, %v640, %v720
        %v839 = vsel %vm825, %v604, %v722
        %v840 = vsel %vm825, %v641, %v724
        %v841 = vsel %vm825, %v607, %v726
        %v842 = vsel %vm825, %v642, %v728
        %v843 = vsel %vm825, %v610, %v730
        %v844 = vsel %vm825, %v643, %v732
        %v845 = vsel %vm825, %v613, %v734
        %vm846 = vcmask 523264
        %v847 = vsel %vm846, %v826, %v766
        %v848 = vsel %vm846, %v827, %v768
        %v849 = vsel %vm846, %v828, %v770
        %v850 = vsel %vm846, %v829, %v772
        %v851 = vsel %vm846, %v830, %v774
        %v852 = vsel %vm846, %v831, %v776
        %v853 = vsel %vm846, %v832, %v778
        %v854 = vsel %vm846, %v833, %v780
        %v855 = vsel %vm846, %v834, %v782
        %v856 = vsel %vm846, %v835, %v784
        %v857 = vsel %vm846, %v836, %v786
        %v858 = vsel %vm846, %v837, %v788
        %v859 = vsel %vm846, %v838, %v790
        %v860 = vsel %vm846, %v839, %v792
        %v861 = vsel %vm846, %v840, %v794
        %v862 = vsel %vm846, %v841, %v796
        %v863 = vsel %vm846, %v842, %v798
        %v864 = vsel %vm846, %v843, %v800
        %v865 = vsel %vm846, %v844, %v802
        %v866 = vsel %vm846, %v845, %v804
        %v867 = vpack.c.bf16 %v848, %v847
        %v868 = vpack.c.bf16 %v850, %v849
        %v869 = vpack.c.bf16 %v852, %v851
        %v870 = vpack.c.bf16 %v854, %v853
        %v871 = vpack.c.bf16 %v856, %v855
        %v872 = vpack.c.bf16 %v858, %v857
        %v873 = vpack.c.bf16 %v860, %v859
        %v874 = vpack.c.bf16 %v862, %v861
        %v875 = vpack.c.bf16 %v864, %v863
        %v876 = vpack.c.bf16 %v866, %v865
        %v877 = vld [vmem:[%s2] sm:$0xf]
        %v878 = vld [vmem:[%s2 + $0x4] sm:$0xf]
        %v879 = vld [vmem:[%s2 + $0x8] sm:$0xf]
        %v880 = vld [vmem:[%s2 + $0xc] sm:$0xf]
        %v881 = vld [vmem:[%s2 + $0x10] sm:$0xf]
        %v882 = vld [vmem:[%s2 + $0x14] sm:$0xf]
        %v883 = vld [vmem:[%s2 + $0x18] sm:$0xf]
        %v884 = vld [vmem:[%s2 + $0x1c] sm:$0xf]
        %v885 = vld [vmem:[%s2 + $0x20] sm:$0xf]
        %v886 = vld [vmem:[%s2 + $0x24] sm:$0xf]
        %v887 = vld [vmem:[%s2 + $0x28] sm:$0xf]
        %v888 = vld [vmem:[%s2 + $0x2c] sm:$0xf]
        %v889 = vld [vmem:[%s2 + $0x30] sm:$0xf]
        %v890 = vld [vmem:[%s2 + $0x34] sm:$0xf]
        %v891 = vld [vmem:[%s2 + $0x38] sm:$0xf]
        %v892 = vld [vmem:[%s2 + $0x3c] sm:$0xf]
        %v893 = vld [vmem:[%s2 + $0x40] sm:$0xf]
        %v894 = vld [vmem:[%s2 + $0x44] sm:$0xf]
        %v895 = vld [vmem:[%s2 + $0x48] sm:$0xf]
        %v896 = vld [vmem:[%s2 + $0x4c] sm:$0xf]
        %v897 = vld [vmem:[%s2 + $0x50] sm:$0xf]
        %v898 = vld [vmem:[%s2 + $0x54] sm:$0xf]
        %v899 = vld [vmem:[%s2 + $0x58] sm:$0xf]
        %v900 = vld [vmem:[%s2 + $0x5c] sm:$0xf]
        %v901 = vld [vmem:[%s2 + $0x60] sm:$0xf]
        %v902 = vld [vmem:[%s2 + $0x64] sm:$0xf]
        %v903 = vld [vmem:[%s2 + $0x68] sm:$0xf]
        %v904 = vld [vmem:[%s2 + $0x6c] sm:$0xf]
        %v905 = vld [vmem:[%s2 + $0x70] sm:$0xf]
        %v906 = vld [vmem:[%s2 + $0x74] sm:$0xf]
        %v907 = vld [vmem:[%s2 + $0x78] sm:$0xf]
        %v908 = vld [vmem:[%s2 + $0x7c] sm:$0xf]
        %v909 = vld [vmem:[%s2 + $0x80] sm:$0xf]
        %v910 = vld [vmem:[%s2 + $0x84] sm:$0xf]
        %v911 = vld [vmem:[%s2 + $0x88] sm:$0xf]
        %v912 = vld [vmem:[%s2 + $0x8c] sm:$0xf]
        %v925 = vunpack.c.l.b16 %v889
        %v926 = vunpack.c.l.b16 %v890
        %v927 = vunpack.c.l.b16 %v891
        %v928 = vunpack.c.l.b16 %v892
        %v929 = vunpack.c.l.b16 %v893
        %v930 = vunpack.c.l.b16 %v894
        %v931 = vunpack.c.l.b16 %v895
        %v932 = vunpack.c.l.b16 %v896
        %v933 = vunpack.c.l.b16 %v897
        %v934 = vunpack.c.l.b16 %v898
        %v935 = vunpack.c.l.b16 %v899
        %v936 = vunpack.c.l.b16 %v900
        %v937 = vpack.c.b16 %v926, %v925
        %v938 = vpack.c.b16 %v928, %v927
        %v939 = vpack.c.b16 %v930, %v929
        %v940 = vpack.c.b16 %v932, %v931
        %v941 = vpack.c.b16 %v934, %v933
        %v942 = vpack.c.b16 %v936, %v935
        %vm949 = vcmask 785408
        %v951 = vsel %vm949, %v868, 0
        %v954 = vsel %vm949, %v869, 0
        %v957 = vsel %vm949, %v870, 0
        %v960 = vsel %vm949, %v871, 0
        %v963 = vsel %vm949, %v872, 0
        %v966 = vsel %vm949, %v873, 0
        %v969 = vsel %vm949, %v874, 0
        %v972 = vsel %vm949, %v875, 0
        %974 = vmatprep.subr.bf16.mxu0 0
        %975 = vmatpush1.bf16.msra.mxu0 0
        %976 = vmatprep.subr.bf16.mxu0 0
        %977 = vmatpush1.bf16.msra.mxu0 0
        %978 = vmatprep.subr.bf16.mxu0 0
        %979 = vmatpush1.bf16.msra.mxu0 %v942
        %980 = vmatprep.subr.bf16.mxu0 0
        %981 = vmatpush1.bf16.msra.mxu0 %v941
        %982 = vmatprep.subr.bf16.mxu0 0
        %983 = vmatpush1.bf16.msra.mxu0 %v940
        %984 = vmatprep.subr.bf16.mxu0 0
        %985 = vmatpush1.bf16.msra.mxu0 %v939
        %986 = vmatprep.subr.bf16.mxu0 0
        %987 = vmatpush1.bf16.msra.mxu0 %v938
        %988 = vmatprep.subr.bf16.mxu0 0
        %989 = vmatpush1.bf16.msra.mxu0 %v937
        %990 = vmatprep.subr.bf16.mxu0 0
        %991 = vmatpush2.bf16.msra.mxu0 0
        %992 = vmatprep.subr.bf16.mxu0 0
        %993 = vmatpush2.bf16.msra.mxu0 0
        %994 = vmatprep.subr.bf16.mxu0 0
        %995 = vmatpush2.bf16.msra.mxu0 0
        %996 = vmatprep.subr.bf16.mxu0 0
        %997 = vmatpush2.bf16.msra.mxu0 0
        %998 = vmatprep.subr.bf16.mxu0 0
        %999 = vmatpush2.bf16.msra.mxu0 0
        %1000 = vmatprep.subr.bf16.mxu0 0
        %1001 = vmatpush2.bf16.msra.mxu0 0
        %1002 = vmatprep.subr.bf16.mxu0 0
        %1003 = vmatpush2.bf16.msra.mxu0 0
        %1004 = vmatprep.subr.bf16.mxu0 0
        %1005 = vmatpush2.bf16.msra.mxu0 0
        %1006 = vmatprep.mubr.bf16.mxu0 0
        %1007 = vmatmul.mubr.bf16.gmra.mxu0 %v951
        %v1008 = vpop.f32.mrf.mxu0
        %v1009 = vadd.f32 0.0, %v1008
        %v1010 = vpop.f32.mrf.mxu0
        %v1011 = vpop.f32.mrf.mxu0
        %v1012 = vadd.f32 0.0, %v1011
        %v1013 = vpop.f32.mrf.mxu0
        %1014 = vmatprep.mubr.bf16.mxu0 0
        %1015 = vmatmul.mubr.bf16.gmra.mxu0 %v954
        %v1016 = vpop.f32.mrf.mxu0
        %v1017 = vadd.f32 0.0, %v1016
        %v1018 = vpop.f32.mrf.mxu0
        %v1019 = vpop.f32.mrf.mxu0
        %v1020 = vadd.f32 0.0, %v1019
        %v1021 = vpop.f32.mrf.mxu0
        %1022 = vmatprep.mubr.bf16.mxu0 0
        %1023 = vmatmul.mubr.bf16.gmra.mxu0 %v957
        %v1024 = vpop.f32.mrf.mxu0
        %v1025 = vadd.f32 0.0, %v1024
        %v1026 = vpop.f32.mrf.mxu0
        %v1027 = vpop.f32.mrf.mxu0
        %v1028 = vadd.f32 0.0, %v1027
        %v1029 = vpop.f32.mrf.mxu0
        %1030 = vmatprep.mubr.bf16.mxu0 0
        %1031 = vmatmul.mubr.bf16.gmra.mxu0 %v960
        %v1032 = vpop.f32.mrf.mxu0
        %v1033 = vadd.f32 0.0, %v1032
        %v1034 = vpop.f32.mrf.mxu0
        %v1035 = vpop.f32.mrf.mxu0
        %v1036 = vadd.f32 0.0, %v1035
        %v1037 = vpop.f32.mrf.mxu0
        %1038 = vmatprep.mubr.bf16.mxu0 0
        %1039 = vmatmul.mubr.bf16.gmra.mxu0 %v963
        %v1040 = vpop.f32.mrf.mxu0
        %v1041 = vadd.f32 0.0, %v1040
        %v1042 = vpop.f32.mrf.mxu0
        %v1043 = vpop.f32.mrf.mxu0
        %v1044 = vadd.f32 0.0, %v1043
        %v1045 = vpop.f32.mrf.mxu0
        %1046 = vmatprep.mubr.bf16.mxu0 0
        %1047 = vmatmul.mubr.bf16.gmra.mxu0 %v966
        %v1048 = vpop.f32.mrf.mxu0
        %v1049 = vadd.f32 0.0, %v1048
        %v1050 = vpop.f32.mrf.mxu0
        %v1051 = vpop.f32.mrf.mxu0
        %v1052 = vadd.f32 0.0, %v1051
        %v1053 = vpop.f32.mrf.mxu0
        %1054 = vmatprep.mubr.bf16.mxu0 0
        %1055 = vmatmul.mubr.bf16.gmra.mxu0 %v969
        %v1056 = vpop.f32.mrf.mxu0
        %v1057 = vadd.f32 0.0, %v1056
        %v1058 = vpop.f32.mrf.mxu0
        %v1059 = vpop.f32.mrf.mxu0
        %v1060 = vadd.f32 0.0, %v1059
        %v1061 = vpop.f32.mrf.mxu0
        %1062 = vmatprep.mubr.bf16.mxu0 0
        %1063 = vmatmul.mubr.bf16.gmra.mxu0 %v972
        %v1064 = vpop.f32.mrf.mxu0
        %v1065 = vadd.f32 0.0, %v1064
        %v1066 = vpop.f32.mrf.mxu0
        %v1067 = vpop.f32.mrf.mxu0
        %v1068 = vadd.f32 0.0, %v1067
        %v1069 = vpop.f32.mrf.mxu0
        %1070 = vdwg.mxu0
        %v1083 = vunpack.c.l.b16 %v877
        %v1084 = vunpack.c.l.b16 %v878
        %v1085 = vunpack.c.l.b16 %v879
        %v1086 = vunpack.c.l.b16 %v880
        %v1087 = vunpack.c.l.b16 %v881
        %v1088 = vunpack.c.l.b16 %v882
        %v1089 = vunpack.c.l.b16 %v883
        %v1090 = vunpack.c.l.b16 %v884
        %v1091 = vunpack.c.l.b16 %v885
        %v1092 = vunpack.c.l.b16 %v886
        %v1093 = vunpack.c.l.b16 %v887
        %v1094 = vunpack.c.l.b16 %v888
        %v1095 = vpack.c.b16 %v1084, %v1083
        %v1096 = vpack.c.b16 %v1086, %v1085
        %v1097 = vpack.c.b16 %v1088, %v1087
        %v1098 = vpack.c.b16 %v1090, %v1089
        %v1099 = vpack.c.b16 %v1092, %v1091
        %v1100 = vpack.c.b16 %v1094, %v1093
        %v1108 = vsel %vm949, %v867, 0
        %1110 = vmatprep.subr.bf16.mxu0 0
        %1111 = vmatpush1.bf16.msra.mxu0 0
        %1112 = vmatprep.subr.bf16.mxu0 0
        %1113 = vmatpush1.bf16.msra.mxu0 0
        %1114 = vmatprep.subr.bf16.mxu0 0
        %1115 = vmatpush1.bf16.msra.mxu0 %v1100
        %1116 = vmatprep.subr.bf16.mxu0 0
        %1117 = vmatpush1.bf16.msra.mxu0 %v1099
        %1118 = vmatprep.subr.bf16.mxu0 0
        %1119 = vmatpush1.bf16.msra.mxu0 %v1098
        %1120 = vmatprep.subr.bf16.mxu0 0
        %1121 = vmatpush1.bf16.msra.mxu0 %v1097
        %1122 = vmatprep.subr.bf16.mxu0 0
        %1123 = vmatpush1.bf16.msra.mxu0 %v1096
        %1124 = vmatprep.subr.bf16.mxu0 0
        %1125 = vmatpush1.bf16.msra.mxu0 %v1095
        %1126 = vmatprep.subr.bf16.mxu0 0
        %1127 = vmatpush2.bf16.msra.mxu0 0
        %1128 = vmatprep.subr.bf16.mxu0 0
        %1129 = vmatpush2.bf16.msra.mxu0 0
        %1130 = vmatprep.subr.bf16.mxu0 0
        %1131 = vmatpush2.bf16.msra.mxu0 0
        %1132 = vmatprep.subr.bf16.mxu0 0
        %1133 = vmatpush2.bf16.msra.mxu0 0
        %1134 = vmatprep.subr.bf16.mxu0 0
        %1135 = vmatpush2.bf16.msra.mxu0 0
        %1136 = vmatprep.subr.bf16.mxu0 0
        %1137 = vmatpush2.bf16.msra.mxu0 0
        %1138 = vmatprep.subr.bf16.mxu0 0
        %1139 = vmatpush2.bf16.msra.mxu0 0
        %1140 = vmatprep.subr.bf16.mxu0 0
        %1141 = vmatpush2.bf16.msra.mxu0 0
        %1142 = vmatprep.mubr.bf16.mxu0 0
        %1143 = vmatmul.mubr.bf16.gmra.mxu0 %v1108
        %v1144 = vpop.f32.mrf.mxu0
        %v1145 = vadd.f32 %v1009, %v1144
        %v1146 = vpop.f32.mrf.mxu0
        %v1147 = vpop.f32.mrf.mxu0
        %v1148 = vadd.f32 %v1012, %v1147
        %v1149 = vpop.f32.mrf.mxu0
        %1150 = vmatprep.mubr.bf16.mxu0 0
        %1151 = vmatmul.mubr.bf16.gmra.mxu0 %v951
        %v1152 = vpop.f32.mrf.mxu0
        %v1153 = vadd.f32 %v1017, %v1152
        %v1154 = vpop.f32.mrf.mxu0
        %v1155 = vpop.f32.mrf.mxu0
        %v1156 = vadd.f32 %v1020, %v1155
        %v1157 = vpop.f32.mrf.mxu0
        %1158 = vmatprep.mubr.bf16.mxu0 0
        %1159 = vmatmul.mubr.bf16.gmra.mxu0 %v954
        %v1160 = vpop.f32.mrf.mxu0
        %v1161 = vadd.f32 %v1025, %v1160
        %v1162 = vpop.f32.mrf.mxu0
        %v1163 = vpop.f32.mrf.mxu0
        %v1164 = vadd.f32 %v1028, %v1163
        %v1165 = vpop.f32.mrf.mxu0
        %1166 = vmatprep.mubr.bf16.mxu0 0
        %1167 = vmatmul.mubr.bf16.gmra.mxu0 %v957
        %v1168 = vpop.f32.mrf.mxu0
        %v1169 = vadd.f32 %v1033, %v1168
        %v1170 = vpop.f32.mrf.mxu0
        %v1171 = vpop.f32.mrf.mxu0
        %v1172 = vadd.f32 %v1036, %v1171
        %v1173 = vpop.f32.mrf.mxu0
        %1174 = vmatprep.mubr.bf16.mxu0 0
        %1175 = vmatmul.mubr.bf16.gmra.mxu0 %v960
        %v1176 = vpop.f32.mrf.mxu0
        %v1177 = vadd.f32 %v1041, %v1176
        %v1178 = vpop.f32.mrf.mxu0
        %v1179 = vpop.f32.mrf.mxu0
        %v1180 = vadd.f32 %v1044, %v1179
        %v1181 = vpop.f32.mrf.mxu0
        %1182 = vmatprep.mubr.bf16.mxu0 0
        %1183 = vmatmul.mubr.bf16.gmra.mxu0 %v963
        %v1184 = vpop.f32.mrf.mxu0
        %v1185 = vadd.f32 %v1049, %v1184
        %v1186 = vpop.f32.mrf.mxu0
        %v1187 = vpop.f32.mrf.mxu0
        %v1188 = vadd.f32 %v1052, %v1187
        %v1189 = vpop.f32.mrf.mxu0
        %1190 = vmatprep.mubr.bf16.mxu0 0
        %1191 = vmatmul.mubr.bf16.gmra.mxu0 %v966
        %v1192 = vpop.f32.mrf.mxu0
        %v1193 = vadd.f32 %v1057, %v1192
        %v1194 = vpop.f32.mrf.mxu0
        %v1195 = vpop.f32.mrf.mxu0
        %v1196 = vadd.f32 %v1060, %v1195
        %v1197 = vpop.f32.mrf.mxu0
        %1198 = vmatprep.mubr.bf16.mxu0 0
        %1199 = vmatmul.mubr.bf16.gmra.mxu0 %v969
        %v1200 = vpop.f32.mrf.mxu0
        %v1201 = vadd.f32 %v1065, %v1200
        %v1202 = vpop.f32.mrf.mxu0
        %v1203 = vpop.f32.mrf.mxu0
        %v1204 = vadd.f32 %v1068, %v1203
        %v1205 = vpop.f32.mrf.mxu0
        %1206 = vdwg.mxu0
        %v1219 = vunpack.c.l.b16 %v901
        %v1220 = vunpack.c.l.b16 %v902
        %v1221 = vunpack.c.l.b16 %v903
        %v1222 = vunpack.c.l.b16 %v904
        %v1223 = vunpack.c.l.b16 %v905
        %v1224 = vunpack.c.l.b16 %v906
        %v1225 = vunpack.c.l.b16 %v907
        %v1226 = vunpack.c.l.b16 %v908
        %v1227 = vunpack.c.l.b16 %v909
        %v1228 = vunpack.c.l.b16 %v910
        %v1229 = vunpack.c.l.b16 %v911
        %v1230 = vunpack.c.l.b16 %v912
        %v1231 = vpack.c.b16 %v1220, %v1219
        %v1232 = vpack.c.b16 %v1222, %v1221
        %v1233 = vpack.c.b16 %v1224, %v1223
        %v1234 = vpack.c.b16 %v1226, %v1225
        %v1235 = vpack.c.b16 %v1228, %v1227
        %v1236 = vpack.c.b16 %v1230, %v1229
        %v1244 = vsel %vm949, %v876, 0
        %1246 = vmatprep.subr.bf16.mxu0 0
        %1247 = vmatpush1.bf16.msra.mxu0 0
        %1248 = vmatprep.subr.bf16.mxu0 0
        %1249 = vmatpush1.bf16.msra.mxu0 0
        %1250 = vmatprep.subr.bf16.mxu0 0
        %1251 = vmatpush1.bf16.msra.mxu0 %v1236
        %1252 = vmatprep.subr.bf16.mxu0 0
        %1253 = vmatpush1.bf16.msra.mxu0 %v1235
        %1254 = vmatprep.subr.bf16.mxu0 0
        %1255 = vmatpush1.bf16.msra.mxu0 %v1234
        %1256 = vmatprep.subr.bf16.mxu0 0
        %1257 = vmatpush1.bf16.msra.mxu0 %v1233
        %1258 = vmatprep.subr.bf16.mxu0 0
        %1259 = vmatpush1.bf16.msra.mxu0 %v1232
        %1260 = vmatprep.subr.bf16.mxu0 0
        %1261 = vmatpush1.bf16.msra.mxu0 %v1231
        %1262 = vmatprep.subr.bf16.mxu0 0
        %1263 = vmatpush2.bf16.msra.mxu0 0
        %1264 = vmatprep.subr.bf16.mxu0 0
        %1265 = vmatpush2.bf16.msra.mxu0 0
        %1266 = vmatprep.subr.bf16.mxu0 0
        %1267 = vmatpush2.bf16.msra.mxu0 0
        %1268 = vmatprep.subr.bf16.mxu0 0
        %1269 = vmatpush2.bf16.msra.mxu0 0
        %1270 = vmatprep.subr.bf16.mxu0 0
        %1271 = vmatpush2.bf16.msra.mxu0 0
        %1272 = vmatprep.subr.bf16.mxu0 0
        %1273 = vmatpush2.bf16.msra.mxu0 0
        %1274 = vmatprep.subr.bf16.mxu0 0
        %1275 = vmatpush2.bf16.msra.mxu0 0
        %1276 = vmatprep.subr.bf16.mxu0 0
        %1277 = vmatpush2.bf16.msra.mxu0 0
        %1278 = vmatprep.mubr.bf16.mxu0 0
        %1279 = vmatmul.mubr.bf16.gmra.mxu0 %v954
        %v1280 = vpop.f32.mrf.mxu0
        %v1281 = vadd.f32 0.0, %v1280
        %v1282 = vpop.f32.mrf.mxu0
        %v1283 = vpop.f32.mrf.mxu0
        %v1284 = vadd.f32 0.0, %v1283
        %v1285 = vpop.f32.mrf.mxu0
        %1286 = vmatprep.mubr.bf16.mxu0 0
        %1287 = vmatmul.mubr.bf16.gmra.mxu0 %v957
        %v1288 = vpop.f32.mrf.mxu0
        %v1289 = vadd.f32 0.0, %v1288
        %v1290 = vpop.f32.mrf.mxu0
        %v1291 = vpop.f32.mrf.mxu0
        %v1292 = vadd.f32 0.0, %v1291
        %v1293 = vpop.f32.mrf.mxu0
        %1294 = vmatprep.mubr.bf16.mxu0 0
        %1295 = vmatmul.mubr.bf16.gmra.mxu0 %v960
        %v1296 = vpop.f32.mrf.mxu0
        %v1297 = vadd.f32 0.0, %v1296
        %v1298 = vpop.f32.mrf.mxu0
        %v1299 = vpop.f32.mrf.mxu0
        %v1300 = vadd.f32 0.0, %v1299
        %v1301 = vpop.f32.mrf.mxu0
        %1302 = vmatprep.mubr.bf16.mxu0 0
        %1303 = vmatmul.mubr.bf16.gmra.mxu0 %v963
        %v1304 = vpop.f32.mrf.mxu0
        %v1305 = vadd.f32 0.0, %v1304
        %v1306 = vpop.f32.mrf.mxu0
        %v1307 = vpop.f32.mrf.mxu0
        %v1308 = vadd.f32 0.0, %v1307
        %v1309 = vpop.f32.mrf.mxu0
        %1310 = vmatprep.mubr.bf16.mxu0 0
        %1311 = vmatmul.mubr.bf16.gmra.mxu0 %v966
        %v1312 = vpop.f32.mrf.mxu0
        %v1313 = vadd.f32 0.0, %v1312
        %v1314 = vpop.f32.mrf.mxu0
        %v1315 = vpop.f32.mrf.mxu0
        %v1316 = vadd.f32 0.0, %v1315
        %v1317 = vpop.f32.mrf.mxu0
        %1318 = vmatprep.mubr.bf16.mxu0 0
        %1319 = vmatmul.mubr.bf16.gmra.mxu0 %v969
        %v1320 = vpop.f32.mrf.mxu0
        %v1321 = vadd.f32 0.0, %v1320
        %v1322 = vpop.f32.mrf.mxu0
        %v1323 = vpop.f32.mrf.mxu0
        %v1324 = vadd.f32 0.0, %v1323
        %v1325 = vpop.f32.mrf.mxu0
        %1326 = vmatprep.mubr.bf16.mxu0 0
        %1327 = vmatmul.mubr.bf16.gmra.mxu0 %v972
        %v1328 = vpop.f32.mrf.mxu0
        %v1329 = vadd.f32 0.0, %v1328
        %v1330 = vpop.f32.mrf.mxu0
        %v1331 = vpop.f32.mrf.mxu0
        %v1332 = vadd.f32 0.0, %v1331
        %v1333 = vpop.f32.mrf.mxu0
        %1334 = vmatprep.mubr.bf16.mxu0 0
        %1335 = vmatmul.mubr.bf16.gmra.mxu0 %v1244
        %v1336 = vpop.f32.mrf.mxu0
        %v1337 = vadd.f32 0.0, %v1336
        %v1338 = vpop.f32.mrf.mxu0
        %v1339 = vpop.f32.mrf.mxu0
        %v1340 = vadd.f32 0.0, %v1339
        %v1341 = vpop.f32.mrf.mxu0
        %1342 = vdwg.mxu0
        %v1343 = vadd.f32 %v1145, %v1281
        %v1344 = vadd.f32 %v1148, %v1284
        %v1345 = vadd.f32 %v1153, %v1289
        %v1346 = vadd.f32 %v1156, %v1292
        %v1347 = vadd.f32 %v1161, %v1297
        %v1348 = vadd.f32 %v1164, %v1300
        %v1349 = vadd.f32 %v1169, %v1305
        %v1350 = vadd.f32 %v1172, %v1308
        %v1351 = vadd.f32 %v1177, %v1313
        %v1352 = vadd.f32 %v1180, %v1316
        %v1353 = vadd.f32 %v1185, %v1321
        %v1354 = vadd.f32 %v1188, %v1324
        %v1355 = vadd.f32 %v1193, %v1329
        %v1356 = vadd.f32 %v1196, %v1332
        %v1357 = vadd.f32 %v1201, %v1337
        %v1358 = vadd.f32 %v1204, %v1340
        %v1359 = vld [vmem:[%s5] sm:$0x1]
        %v1361 = vlaneseq
        %v1362 = vshrl.u32 %v1361, 7
        %v1363 = vsub.s32 0, %v1362
        %v1364 = vrot.slane %v1359, %v1363
        %v1366 = vadd.f32 %v1343, %v1364
        %v1367 = vadd.f32 %v1344, %v1364
        %v1368 = vadd.f32 %v1345, %v1364
        %v1369 = vadd.f32 %v1346, %v1364
        %v1370 = vadd.f32 %v1347, %v1364
        %v1371 = vadd.f32 %v1348, %v1364
        %v1372 = vadd.f32 %v1349, %v1364
        %v1373 = vadd.f32 %v1350, %v1364
        %v1374 = vadd.f32 %v1351, %v1364
        %v1375 = vadd.f32 %v1352, %v1364
        %v1376 = vadd.f32 %v1353, %v1364
        %v1377 = vadd.f32 %v1354, %v1364
        %v1378 = vadd.f32 %v1355, %v1364
        %v1379 = vadd.f32 %v1356, %v1364
        %v1380 = vadd.f32 %v1357, %v1364
        %v1381 = vadd.f32 %v1358, %v1364
        %v1382 = vmax.f32 %v1366, 0.0
        %v1383 = vmax.f32 %v1367, 0.0
        %v1384 = vmax.f32 %v1368, 0.0
        %v1385 = vmax.f32 %v1369, 0.0
        %v1386 = vmax.f32 %v1370, 0.0
        %v1387 = vmax.f32 %v1371, 0.0
        %v1388 = vmax.f32 %v1372, 0.0
        %v1389 = vmax.f32 %v1373, 0.0
        %v1390 = vmax.f32 %v1374, 0.0
        %v1391 = vmax.f32 %v1375, 0.0
        %v1392 = vmax.f32 %v1376, 0.0
        %v1393 = vmax.f32 %v1377, 0.0
        %v1394 = vmax.f32 %v1378, 0.0
        %v1395 = vmax.f32 %v1379, 0.0
        %v1396 = vmax.f32 %v1380, 0.0
        %v1397 = vmax.f32 %v1381, 0.0
        %v1398 = vpack.c.bf16 %v1383, %v1382
        %v1399 = vpack.c.bf16 %v1385, %v1384
        %v1400 = vpack.c.bf16 %v1387, %v1386
        %v1401 = vpack.c.bf16 %v1389, %v1388
        %v1402 = vpack.c.bf16 %v1391, %v1390
        %v1403 = vpack.c.bf16 %v1393, %v1392
        %v1404 = vpack.c.bf16 %v1395, %v1394
        %v1405 = vpack.c.bf16 %v1397, %v1396
        %v1406 = vld [vmem:[%s3] sm:$0xf]
        %v1407 = vld [vmem:[%s3 + $0x4] sm:$0xf]
        %v1408 = vld [vmem:[%s3 + $0x8] sm:$0xf]
        %v1409 = vld [vmem:[%s3 + $0xc] sm:$0xf]
        %v1410 = vld [vmem:[%s6] sm:$0x1]
        %v1412 = vlaneseq
        %v1413 = vshrl.u32 %v1412, 7
        %v1414 = vsub.s32 0, %v1413
        %v1415 = vrot.slane %v1410, %v1414
        %v1421 = vunpack.c.l.b16 %v1406
        %v1422 = vunpack.c.l.b16 %v1407
        %v1423 = vunpack.c.l.b16 %v1408
        %v1424 = vunpack.c.l.b16 %v1409
        %v1425 = vpack.c.b16 %v1422, %v1421
        %v1426 = vpack.c.b16 %v1424, %v1423
        %v1430 = vsel %vm825, %v1398, 0
        %v1433 = vsel %vm825, %v1399, 0
        %v1436 = vsel %vm825, %v1400, 0
        %v1439 = vsel %vm825, %v1401, 0
        %v1442 = vsel %vm825, %v1402, 0
        %v1445 = vsel %vm825, %v1403, 0
        %v1448 = vsel %vm825, %v1404, 0
        %v1451 = vsel %vm825, %v1405, 0
        %1453 = vmatprep.subr.bf16.mxu0 0
        %1454 = vmatpush1.bf16.msra.mxu0 0
        %1455 = vmatprep.subr.bf16.mxu0 0
        %1456 = vmatpush1.bf16.msra.mxu0 0
        %1457 = vmatprep.subr.bf16.mxu0 0
        %1458 = vmatpush1.bf16.msra.mxu0 0
        %1459 = vmatprep.subr.bf16.mxu0 0
        %1460 = vmatpush1.bf16.msra.mxu0 0
        %1461 = vmatprep.subr.bf16.mxu0 0
        %1462 = vmatpush1.bf16.msra.mxu0 0
        %1463 = vmatprep.subr.bf16.mxu0 0
        %1464 = vmatpush1.bf16.msra.mxu0 0
        %1465 = vmatprep.subr.bf16.mxu0 0
        %1466 = vmatpush1.bf16.msra.mxu0 %v1426
        %1467 = vmatprep.subr.bf16.mxu0 0
        %1468 = vmatpush1.bf16.msra.mxu0 %v1425
        %1469 = vmatprep.subr.bf16.mxu0 0
        %1470 = vmatpush2.bf16.msra.mxu0 0
        %1471 = vmatprep.subr.bf16.mxu0 0
        %1472 = vmatpush2.bf16.msra.mxu0 0
        %1473 = vmatprep.subr.bf16.mxu0 0
        %1474 = vmatpush2.bf16.msra.mxu0 0
        %1475 = vmatprep.subr.bf16.mxu0 0
        %1476 = vmatpush2.bf16.msra.mxu0 0
        %1477 = vmatprep.subr.bf16.mxu0 0
        %1478 = vmatpush2.bf16.msra.mxu0 0
        %1479 = vmatprep.subr.bf16.mxu0 0
        %1480 = vmatpush2.bf16.msra.mxu0 0
        %1481 = vmatprep.subr.bf16.mxu0 0
        %1482 = vmatpush2.bf16.msra.mxu0 0
        %1483 = vmatprep.subr.bf16.mxu0 0
        %1484 = vmatpush2.bf16.msra.mxu0 0
        %1485 = vmatprep.mubr.bf16.mxu0 0
        %1486 = vmatmul.mubr.bf16.gmra.mxu0 %v1430
        %v1487 = vpop.f32.mrf.mxu0
        %v1488 = vadd.f32 %v1415, %v1487
        %v1489 = vpop.f32.mrf.mxu0
        %v1490 = vpop.f32.mrf.mxu0
        %v1491 = vadd.f32 %v1415, %v1490
        %v1492 = vpop.f32.mrf.mxu0
        %1493 = vmatprep.mubr.bf16.mxu0 0
        %1494 = vmatmul.mubr.bf16.gmra.mxu0 %v1433
        %v1495 = vpop.f32.mrf.mxu0
        %v1496 = vadd.f32 %v1415, %v1495
        %v1497 = vpop.f32.mrf.mxu0
        %v1498 = vpop.f32.mrf.mxu0
        %v1499 = vadd.f32 %v1415, %v1498
        %v1500 = vpop.f32.mrf.mxu0
        %1501 = vmatprep.mubr.bf16.mxu0 0
        %1502 = vmatmul.mubr.bf16.gmra.mxu0 %v1436
        %v1503 = vpop.f32.mrf.mxu0
        %v1504 = vadd.f32 %v1415, %v1503
        %v1505 = vpop.f32.mrf.mxu0
        %v1506 = vpop.f32.mrf.mxu0
        %v1507 = vadd.f32 %v1415, %v1506
        %v1508 = vpop.f32.mrf.mxu0
        %1509 = vmatprep.mubr.bf16.mxu0 0
        %1510 = vmatmul.mubr.bf16.gmra.mxu0 %v1439
        %v1511 = vpop.f32.mrf.mxu0
        %v1512 = vadd.f32 %v1415, %v1511
        %v1513 = vpop.f32.mrf.mxu0
        %v1514 = vpop.f32.mrf.mxu0
        %v1515 = vadd.f32 %v1415, %v1514
        %v1516 = vpop.f32.mrf.mxu0
        %1517 = vmatprep.mubr.bf16.mxu0 0
        %1518 = vmatmul.mubr.bf16.gmra.mxu0 %v1442
        %v1519 = vpop.f32.mrf.mxu0
        %v1520 = vadd.f32 %v1415, %v1519
        %v1521 = vpop.f32.mrf.mxu0
        %v1522 = vpop.f32.mrf.mxu0
        %v1523 = vadd.f32 %v1415, %v1522
        %v1524 = vpop.f32.mrf.mxu0
        %1525 = vmatprep.mubr.bf16.mxu0 0
        %1526 = vmatmul.mubr.bf16.gmra.mxu0 %v1445
        %v1527 = vpop.f32.mrf.mxu0
        %v1528 = vadd.f32 %v1415, %v1527
        %v1529 = vpop.f32.mrf.mxu0
        %v1530 = vpop.f32.mrf.mxu0
        %v1531 = vadd.f32 %v1415, %v1530
        %v1532 = vpop.f32.mrf.mxu0
        %1533 = vmatprep.mubr.bf16.mxu0 0
        %1534 = vmatmul.mubr.bf16.gmra.mxu0 %v1448
        %v1535 = vpop.f32.mrf.mxu0
        %v1536 = vadd.f32 %v1415, %v1535
        %v1537 = vpop.f32.mrf.mxu0
        %v1538 = vpop.f32.mrf.mxu0
        %v1539 = vadd.f32 %v1415, %v1538
        %v1540 = vpop.f32.mrf.mxu0
        %1541 = vmatprep.mubr.bf16.mxu0 0
        %1542 = vmatmul.mubr.bf16.gmra.mxu0 %v1451
        %v1543 = vpop.f32.mrf.mxu0
        %v1544 = vadd.f32 %v1415, %v1543
        %v1545 = vpop.f32.mrf.mxu0
        %v1546 = vpop.f32.mrf.mxu0
        %v1547 = vadd.f32 %v1415, %v1546
        %v1548 = vpop.f32.mrf.mxu0
        %1549 = vdwg.mxu0
        %s1550 = scalar_lea.vmem [#allocation2], 16
        %v1551 = vld [vmem:[%s1550] sm:$0xff]
        %v1552 = vld [vmem:[%s1550 + $0x8] sm:$0xff]
        %v1553 = vld [vmem:[%s1550 + $0x10] sm:$0xff]
        %v1554 = vld [vmem:[%s1550 + $0x18] sm:$0xff]
        %v1555 = vld [vmem:[%s1550 + $0x20] sm:$0xff]
        %v1556 = vld [vmem:[%s1550 + $0x28] sm:$0xff]
        %v1557 = vld [vmem:[%s1550 + $0x30] sm:$0xff]
        %v1558 = vld [vmem:[%s1550 + $0x38] sm:$0xff]
        %v1559 = vld [vmem:[%s1550 + $0x40] sm:$0xff]
        %v1560 = vld [vmem:[%s1550 + $0x48] sm:$0xff]
        %v1561 = vld [vmem:[%s1550 + $0x50] sm:$0xff]
        %v1562 = vld [vmem:[%s1550 + $0x58] sm:$0xff]
        %v1563 = vld [vmem:[%s1550 + $0x60] sm:$0xff]
        %v1564 = vld [vmem:[%s1550 + $0x68] sm:$0xff]
        %v1565 = vld [vmem:[%s1550 + $0x70] sm:$0xff]
        %v1566 = vld [vmem:[%s1550 + $0x78] sm:$0xff]
        %v1567 = vadd.f32 %v1488, %v1551
        %v1568 = vadd.f32 %v1491, %v1552
        %v1569 = vadd.f32 %v1496, %v1553
        %v1570 = vadd.f32 %v1499, %v1554
        %v1571 = vadd.f32 %v1504, %v1555
        %v1572 = vadd.f32 %v1507, %v1556
        %v1573 = vadd.f32 %v1512, %v1557
        %v1574 = vadd.f32 %v1515, %v1558
        %v1575 = vadd.f32 %v1520, %v1559
        %v1576 = vadd.f32 %v1523, %v1560
        %v1577 = vadd.f32 %v1528, %v1561
        %v1578 = vadd.f32 %v1531, %v1562
        %v1579 = vadd.f32 %v1536, %v1563
        %v1580 = vadd.f32 %v1539, %v1564
        %v1581 = vadd.f32 %v1544, %v1565
        %v1582 = vadd.f32 %v1547, %v1566
        %v1583 = vmax.f32 %v1567, 0.0
        %v1584 = vmax.f32 %v1568, 0.0
        %v1585 = vmax.f32 %v1569, 0.0
        %v1586 = vmax.f32 %v1570, 0.0
        %v1587 = vmax.f32 %v1571, 0.0
        %v1588 = vmax.f32 %v1572, 0.0
        %v1589 = vmax.f32 %v1573, 0.0
        %v1590 = vmax.f32 %v1574, 0.0
        %v1591 = vmax.f32 %v1575, 0.0
        %v1592 = vmax.f32 %v1576, 0.0
        %v1593 = vmax.f32 %v1577, 0.0
        %v1594 = vmax.f32 %v1578, 0.0
        %v1595 = vmax.f32 %v1579, 0.0
        %v1596 = vmax.f32 %v1580, 0.0
        %v1597 = vmax.f32 %v1581, 0.0
        %v1598 = vmax.f32 %v1582, 0.0
        %1599 = vst [vmem:[%s244] sm:$0xff] %v1583
        %1600 = vst [vmem:[%s244 + $0x8] sm:$0xff] %v1584
        %1601 = vst [vmem:[%s244 + $0x10] sm:$0xff] %v1585
        %1602 = vst [vmem:[%s244 + $0x18] sm:$0xff] %v1586
        %1603 = vst [vmem:[%s244 + $0x20] sm:$0xff] %v1587
        %1604 = vst [vmem:[%s244 + $0x28] sm:$0xff] %v1588
        %1605 = vst [vmem:[%s244 + $0x30] sm:$0xff] %v1589
        %1606 = vst [vmem:[%s244 + $0x38] sm:$0xff] %v1590
        %1607 = vst [vmem:[%s244 + $0x40] sm:$0xff] %v1591
        %1608 = vst [vmem:[%s244 + $0x48] sm:$0xff] %v1592
        %1609 = vst [vmem:[%s244 + $0x50] sm:$0xff] %v1593
        %1610 = vst [vmem:[%s244 + $0x58] sm:$0xff] %v1594
        %1611 = vst [vmem:[%s244 + $0x60] sm:$0xff] %v1595
        %1612 = vst [vmem:[%s244 + $0x68] sm:$0xff] %v1596
        %1613 = vst [vmem:[%s244 + $0x70] sm:$0xff] %v1597
        %1614 = vst [vmem:[%s244 + $0x78] sm:$0xff] %v1598
        %s1615 = sand.u32 %s169, 1
        %s1616 = scalar_lea.sflag [#allocation5], %s1615
        %s1617 = sand.u32 %s169, 1
        %s1618 = smul.addr %s1617, 128
        %s1619 = scalar_lea.vmem [#allocation4], %s1618
        // Predicated region
        $region49: #{tpu_custom_call.1} parent=43 // pred_check
          %p1620 = pneg %p179
        $region50: #{tpu_custom_call.1} parent=43 // pred_check_branch
          %1622 = sbr.rel (%p1620) target = $region52
        $region51: #{tpu_custom_call.1} parent=43 // pred_region
          %s1623 = smul.u32 8, %s26
          %s1625 = ssub.s32 2048, 2048
          %1626 = vsyncadd %s1616, %s1625
          %s1627 = smul.addr %s1623, 2
          %s1628 = smul.addr %s25, 32
          %s1629 = sadd.s32 %s1627, %s1628
          %s1630 = smul.addr %s1629, 128
          %s1631 = scalar_lea.hbm %s7, %s1630
          %s1632 = sshll.u32 %s1619, 4
          %s1633 = int_to_ptr.vmem [resolvable:$true] %s1632
          %1638 = dma.vmem_to_hbm [thread:$0]  %s1633, 2048, %s1631, %s1616, 128, 128, 8
        $region52: #{tpu_custom_call.1} parent=43 // pred_fallthru
          _
      $region44: #{tpu_custom_call.1} parent=5 // pred_fallthru
        _
      %p1639 = scmp.le.s32.totalorder 2, %s16
      // Predicated region
      $region53: #{tpu_custom_call.1} parent=5 // pred_check
        %p1640 = pneg %p1639
      $region54: #{tpu_custom_call.1} parent=5 // pred_check_branch
        %1642 = sbr.rel (%p1640) target = $region56
      $region55: #{tpu_custom_call.1} parent=5 // pred_region
        %s1643 = ssub.s32 %s16, 2
        // Predicated region
        $region57: #{tpu_custom_call.1} parent=55 // pred_check
          %p1644 = pneg %p185
        $region58: #{tpu_custom_call.1} parent=55 // pred_check_branch
          %1646 = sbr.rel (%p1644) target = $region60
        $region59: #{tpu_custom_call.1} parent=55 // pred_region
          %s1647 = sand.u32 %s170, 1
          %s1648 = scalar_lea.sflag [#allocation5], %s1647
          %s1649 = sand.u32 %s170, 1
          %s1650 = smul.addr %s1649, 128
          %s1651 = scalar_lea.vmem [#allocation4], %s1650
          %1652 = dma.done %s1648, 2048
        $region60: #{tpu_custom_call.1} parent=55 // pred_fallthru
          _
      $region56: #{tpu_custom_call.1} parent=5 // pred_fallthru
        _
    $region6: #{tpu_custom_call.1} parent=1 // loop_footer
      %s20 = sadd.s32 1, %s16
    $region7: #{tpu_custom_call.1} parent=1 // loop_footer_branch
      %15 = sbr.rel target = $region3
    $region8: #{tpu_custom_call.1} parent=1 // loop_exit
      _
    %1653 = vsyncpa [#allocation5], 1
    %s1654 = scalar_lea.sflag [#allocation5], 1
    %1655 = vsyncpa %s1654, 1
  %1656 = vsyncmov [#allocation3]
  %s1657 = vpop.sfrf %1656
  %p1658 = scmp.eq.s32.totalorder %s1657, 0
  %p1659 = pneg %p1658
  %1661 = shalt.err (%p1659)

</llo_original>
